<compile_context>
chip_gen: v7x
topology: tpu7x:2x2x1
jax: 0.10.0
libtpu: 0.0.40
codegen_flags: <defaults>
</compile_context>

<pallas_src>
import math
import numpy as np
import jax
import jax.numpy as jnp
from jax.experimental import pallas as pl
from jax.experimental.pallas import tpu as pltpu

TWO_PI = 2.0 * math.pi
HALF_PI = 0.5 * math.pi


def _fourier_net_kernel(x_ref,       # VMEM (2, T)     shifted coords, lanes = flattened B*H*W
                        fc_ref,      # VMEM (2M, 3)    [2pi*Bx | 2pi*By | {0, pi/2}] (rows duplicated)
                        w0_ref,      # VMEM (C, 2M)    bf16  W0^T
                        b0_ref,      # VMEM (C, 1)     f32
                        wh_ref,      # VMEM (Lh, C, C) bf16  hidden W^T
                        bh_ref,      # VMEM (Lh, C, 1) f32
                        wout_ref,    # VMEM (3, C)     bf16  Wout^T
                        bout_ref,    # VMEM (3, 1)     f32
                        o_ref):      # VMEM (3, T)     f32 sigmoid output (scale/clamp in wrapper)
    c0 = x_ref[0:1, :]               # (1, T)
    c1 = x_ref[1:2, :]               # (1, T)
    bx = fc_ref[:, 0:1]              # (2M, 1)
    by = fc_ref[:, 1:2]
    off = fc_ref[:, 2:3]

    # Fourier phase on the VPU (K=2 contraction as broadcast-mults); the second
    # half of the rows carries a +pi/2 offset so one sin() produces [sin; cos].
    phase = bx * c0 + by * c1 + off                           # (2M, T)
    feat = jnp.sin(phase).astype(jnp.bfloat16)                # (2M, T)

    # Layer 0: single fused K=2M bf16 matmul, f32 accumulation.
    h = jnp.dot(w0_ref[...], feat, preferred_element_type=jnp.float32)
    h = jnp.maximum(h + b0_ref[...], 0.0)                     # (C, T)

    # Hidden layers (static trace-time unroll).
    for l in range(wh_ref.shape[0]):
        h = jnp.dot(wh_ref[l], h.astype(jnp.bfloat16),
                    preferred_element_type=jnp.float32)
        h = jnp.maximum(h + bh_ref[l], 0.0)

    logits = jnp.dot(wout_ref[...], h.astype(jnp.bfloat16),
                     preferred_element_type=jnp.float32) + bout_ref[...]   # (3, T)
    o_ref[...] = jax.nn.sigmoid(logits)


def _plan_tiles(total, cap=8192):
    """Lane tile T (multiple of 128, <= cap) and tile count so n*T >= total,
    with >= 2 grid steps whenever possible (v7x: 2 TensorCores per chip)."""
    tp = ((max(total, 1) + 127) // 128) * 128     # pad to a multiple of 128 lanes
    n = max(1, -(-tp // cap))
    if tp >= 256:
        n = max(n, 2)
    t = ((-(-tp // n) + 127) // 128) * 128
    n = -(-tp // t)
    return t, n, n * t


def fourier_network_forward(x, p, sample_idx=None, dx_percent=None, dy_percent=None):
    """x: (B, H, W, 2) float32; p: parameter dict; sample_idx: (B,) int32."""
    Bn, H, W, _ = x.shape
    HW = H * W
    total = Bn * HW
    Cc = p["W0"].shape[1]
    M = p["B"].shape[0]
    Lh = p["Wh"].shape[0]
    T, n_tiles, padded = _plan_tiles(total)

    x = x.astype(jnp.float32)
    transforms = None
    scales = None
    if sample_idx is not None:
        if dx_percent is not None and dy_percent is not None:
            dxdy = jnp.stack([jnp.reshape(dx_percent, (-1,)),
                              jnp.reshape(dy_percent, (-1,))], axis=-1).astype(jnp.float32)
        else:
            dxdy = p["tv"][sample_idx]                         # (B, 2)
        x = x + dxdy[:, None, None, :]                         # shift fused with coords transpose
        transforms = [dxdy[:, 0:1], dxdy[:, 1:2]]
        scales = jnp.where((sample_idx != 0)[:, None], p["cs"][sample_idx], 1.0)   # (B, 3)

    # Coords with the flattened batch*spatial axis on lanes: (2, B*H*W), zero-padded.
    coords = jnp.transpose(x.reshape(total, 2), (1, 0))
    if padded > total:
        coords = jnp.pad(coords, ((0, 0), (0, padded - total)))

    # Fourier coefficients: rows [0:M) -> sin half, [M:2M) -> cos half (+pi/2).
    b2 = jnp.concatenate([p["B"], p["B"]], axis=0).astype(jnp.float32) * TWO_PI   # (2M, 2)
    off = jnp.concatenate([jnp.zeros((M, 1), jnp.float32),
                           jnp.full((M, 1), HALF_PI, jnp.float32)], axis=0)       # (2M, 1)
    fc = jnp.concatenate([b2, off], axis=1)                    # (2M, 3)

    # Weights pre-transposed (W^T @ h so HW sits on the MXU N-dim) and pre-cast to bf16.
    W0T = p["W0"].T.astype(jnp.bfloat16)                       # (C, 2M)
    b0 = p["b0"].reshape(Cc, 1).astype(jnp.float32)
    WhT = jnp.transpose(p["Wh"], (0, 2, 1)).astype(jnp.bfloat16)    # (Lh, C, C)
    bh = p["bh"].reshape(Lh, Cc, 1).astype(jnp.float32)
    WoutT = p["Wout"].T.astype(jnp.bfloat16)                   # (3, C)
    bout = p["bout"].reshape(3, 1).astype(jnp.float32)

    out_flat = pl.pallas_call(
        _fourier_net_kernel,
        out_shape=jax.ShapeDtypeStruct((3, padded), jnp.float32),
        grid=(n_tiles,),
        in_specs=[
            pl.BlockSpec((2, T), lambda i: (0, i)),            # coords tile
            pl.BlockSpec((2 * M, 3), lambda i: (0, 0)),        # fourier coeffs
            pl.BlockSpec((Cc, 2 * M), lambda i: (0, 0)),       # W0^T (bf16)
            pl.BlockSpec((Cc, 1), lambda i: (0, 0)),           # b0
            pl.BlockSpec((Lh, Cc, Cc), lambda i: (0, 0, 0)),   # hidden W^T (bf16)
            pl.BlockSpec((Lh, Cc, 1), lambda i: (0, 0, 0)),    # hidden b
            pl.BlockSpec((3, Cc), lambda i: (0, 0)),           # Wout^T (bf16)
            pl.BlockSpec((3, 1), lambda i: (0, 0)),            # bout
        ],
        out_specs=pl.BlockSpec((3, T), lambda i: (0, i)),      # lane-dense output
        compiler_params=pltpu.CompilerParams(
            dimension_semantics=("parallel",)),
    )(coords, fc, W0T, b0, WhT, bh, WoutT, bout)

    # Back to NHWC; per-sample color scale + clamp ride on this transpose pass (free in XLA).
    out = jnp.transpose(out_flat[:, :total].reshape(3, Bn, HW), (1, 2, 0)).reshape(Bn, H, W, 3)
    if sample_idx is not None:
        out = jnp.clip(out * scales[:, None, None, :], 0.0, 1.0)
    return out, transforms


def reference_forward(x, p, sample_idx):
    """Pure-JAX f32 replica of the PyTorch forward for verification."""
    dxdy = p["tv"][sample_idx]
    xs = x + dxdy[:, None, None, :]
    xp = TWO_PI * xs @ p["B"].T
    h = jnp.concatenate([jnp.sin(xp), jnp.cos(xp)], -1)
    h = jax.nn.relu(h @ p["W0"] + p["b0"])
    for l in range(p["Wh"].shape[0]):
        h = jax.nn.relu(h @ p["Wh"][l] + p["bh"][l])
    out = jax.nn.sigmoid(h @ p["Wout"] + p["bout"])
    scales = jnp.where((sample_idx != 0)[:, None], p["cs"][sample_idx], 1.0)
    return jnp.clip(out * scales[:, None, None, :], 0.0, 1.0)


if __name__ == "__main__":
    # module config (small): input_dim=32 -> 16 Fourier features, 4 layers,
    # 32 channels, 3 samples, coordinate_dim=2
    input_dim, num_layers, num_channels, num_samples, coord_dim = 32, 4, 32, 3, 2
    M = input_dim // 2
    Lh = num_layers - 2

    key = jax.random.PRNGKey(0)
    ks = jax.random.split(key, 10)
    p = {
        "B":    jax.random.normal(ks[0], (M, coord_dim), jnp.float32) * 10.0,  # get_B_gauss(scale=10)
        "W0":   jax.random.normal(ks[1], (input_dim, num_channels), jnp.float32) / math.sqrt(input_dim),
        "b0":   jax.random.normal(ks[2], (num_channels,), jnp.float32) * 0.01,
        "Wh":   jax.random.normal(ks[3], (Lh, num_channels, num_channels), jnp.float32) / math.sqrt(num_channels),
        "bh":   jax.random.normal(ks[4], (Lh, num_channels), jnp.float32) * 0.01,
        "Wout": jax.random.normal(ks[5], (num_channels, 3), jnp.float32) / math.sqrt(num_channels),
        "bout": jax.random.normal(ks[6], (3,), jnp.float32) * 0.01,
    }
    # transform_vectors / color_scales: torch inits them to zeros / ones; use
    # small non-trivial values for idx != 0 so the shift and color-scale paths
    # are actually exercised (idx 0 keeps the frozen defaults).
    tv = jax.random.normal(ks[7], (num_samples, coord_dim), jnp.float32) * 0.05
    p["tv"] = tv.at[0].set(0.0)
    cs = 1.0 + jax.random.normal(ks[8], (num_samples, 3), jnp.float32) * 0.1
    p["cs"] = cs.at[0].set(1.0)

    # example input: batch=2, 16x16 coordinate grid values in [0, 1]
    Bn, H, W = 2, 16, 16
    x = jax.random.uniform(ks[9], (Bn, H, W, coord_dim), jnp.float32)
    sample_idx = jnp.array([1, 2], dtype=jnp.int32)

    out, transforms = fourier_network_forward(x, p, sample_idx)
    out = jax.block_until_ready(out)

    ref = jax.block_until_ready(reference_forward(x, p, sample_idx))
    assert out.shape == (Bn, H, W, 3)
    assert transforms[0].shape == (Bn, 1) and transforms[1].shape == (Bn, 1)
    # bf16 matmul operands (f32 accumulation) -> looser tolerance than pure f32
    np.testing.assert_allclose(np.asarray(out), np.asarray(ref), atol=2.5e-2, rtol=2.5e-2)

    print("KERNEL_OK")
</pallas_src>

<mosaic_0001>
module attributes {stable_mosaic.version = 11 : i64} {
  func.func @_fourier_net_kernel(%arg0: i32, %arg1: memref<2x256xf32, #tpu.memory_space<vmem>>, %arg2: memref<32x3xf32, #tpu.memory_space<vmem>>, %arg3: memref<32x32xbf16, #tpu.memory_space<vmem>>, %arg4: memref<32x1xf32, #tpu.memory_space<vmem>>, %arg5: memref<2x32x32xbf16, #tpu.memory_space<vmem>>, %arg6: memref<2x32x1xf32, #tpu.memory_space<vmem>>, %arg7: memref<3x32xbf16, #tpu.memory_space<vmem>>, %arg8: memref<3x1xf32, #tpu.memory_space<vmem>>, %arg9: memref<3x256xf32, #tpu.memory_space<vmem>>) attributes {dimension_semantics = [#tpu.dimension_semantics<parallel>], iteration_bounds = array<i64: 2>, scalar_prefetch = 0 : i64, scratch_operands = 0 : i64, tpu.core_type = #tpu.core_type<tc>, window_params = [{transform_indices = @transform_0, window_bounds = array<i64: 2, 256>}, {pipeline_mode = #tpu.pipeline_mode<synchronous>, transform_indices = @transform_1, window_bounds = array<i64: 32, 3>}, {pipeline_mode = #tpu.pipeline_mode<synchronous>, transform_indices = @transform_2, window_bounds = array<i64: 32, 32>}, {pipeline_mode = #tpu.pipeline_mode<synchronous>, transform_indices = @transform_3, window_bounds = array<i64: 32, 1>}, {pipeline_mode = #tpu.pipeline_mode<synchronous>, transform_indices = @transform_4, window_bounds = array<i64: 2, 32, 32>}, {pipeline_mode = #tpu.pipeline_mode<synchronous>, transform_indices = @transform_5, window_bounds = array<i64: 2, 32, 1>}, {pipeline_mode = #tpu.pipeline_mode<synchronous>, transform_indices = @transform_6, window_bounds = array<i64: 3, 32>}, {pipeline_mode = #tpu.pipeline_mode<synchronous>, transform_indices = @transform_7, window_bounds = array<i64: 3, 1>}, {transform_indices = @transform_8, window_bounds = array<i64: 3, 256>}]} {
    %c0 = arith.constant 0 : index
    %c0_0 = arith.constant 0 : index
    %0 = vector.load %arg1[%c0, %c0_0] : memref<2x256xf32, #tpu.memory_space<vmem>>, vector<1x256xf32>
    %c1 = arith.constant 1 : index
    %c0_1 = arith.constant 0 : index
    %1 = vector.load %arg1[%c1, %c0_1] : memref<2x256xf32, #tpu.memory_space<vmem>>, vector<1x256xf32>
    %c0_2 = arith.constant 0 : index
    %c0_3 = arith.constant 0 : index
    %2 = vector.load %arg2[%c0_2, %c0_3] : memref<32x3xf32, #tpu.memory_space<vmem>>, vector<32x1xf32>
    %c0_4 = arith.constant 0 : index
    %c1_5 = arith.constant 1 : index
    %3 = vector.load %arg2[%c0_4, %c1_5] : memref<32x3xf32, #tpu.memory_space<vmem>>, vector<32x1xf32>
    %c0_6 = arith.constant 0 : index
    %c2 = arith.constant 2 : index
    %4 = vector.load %arg2[%c0_6, %c2] : memref<32x3xf32, #tpu.memory_space<vmem>>, vector<32x1xf32>
    %5 = vector.broadcast %2 : vector<32x1xf32> to vector<32x256xf32>
    %6 = vector.broadcast %0 : vector<1x256xf32> to vector<32x256xf32>
    %7 = arith.mulf %5, %6 : vector<32x256xf32>
    %8 = vector.broadcast %3 : vector<32x1xf32> to vector<32x256xf32>
    %9 = vector.broadcast %1 : vector<1x256xf32> to vector<32x256xf32>
    %10 = arith.mulf %8, %9 : vector<32x256xf32>
    %11 = arith.addf %7, %10 : vector<32x256xf32>
    %12 = vector.broadcast %4 : vector<32x1xf32> to vector<32x256xf32>
    %13 = arith.addf %11, %12 : vector<32x256xf32>
    %14 = math.sin %13 : vector<32x256xf32>
    %15 = arith.truncf %14 : vector<32x256xf32> to vector<32x256xbf16>
    %c0_7 = arith.constant 0 : index
    %c0_8 = arith.constant 0 : index
    %16 = vector.load %arg3[%c0_7, %c0_8] : memref<32x32xbf16, #tpu.memory_space<vmem>>, vector<32x32xbf16>
    %cst = arith.constant dense<0.000000e+00> : vector<32x256xf32>
    %17 = tpu.matmul %16, %15, %cst {dimension_numbers = #tpu.dot_dimension_numbers<[1], [0], [0], [1], [0, 0, 1, 1], [], []>} : vector<32x32xbf16>, vector<32x256xbf16>, vector<32x256xf32> -> vector<32x256xf32>
    %c0_9 = arith.constant 0 : index
    %c0_10 = arith.constant 0 : index
    %18 = vector.load %arg4[%c0_9, %c0_10] : memref<32x1xf32, #tpu.memory_space<vmem>>, vector<32x1xf32>
    %19 = vector.broadcast %18 : vector<32x1xf32> to vector<32x256xf32>
    %20 = arith.addf %17, %19 : vector<32x256xf32>
    %cst_11 = arith.constant 0.000000e+00 : f32
    %21 = vector.broadcast %cst_11 : f32 to vector<32x256xf32>
    %22 = arith.maximumf %20, %21 : vector<32x256xf32>
    %c0_12 = arith.constant 0 : index
    %c0_13 = arith.constant 0 : index
    %c0_14 = arith.constant 0 : index
    %23 = vector.load %arg5[%c0_12, %c0_13, %c0_14] : memref<2x32x32xbf16, #tpu.memory_space<vmem>>, vector<1x32x32xbf16>
    %24 = vector.shape_cast %23 : vector<1x32x32xbf16> to vector<32x32xbf16>
    %25 = arith.truncf %22 : vector<32x256xf32> to vector<32x256xbf16>
    %cst_15 = arith.constant dense<0.000000e+00> : vector<32x256xf32>
    %26 = tpu.matmul %24, %25, %cst_15 {dimension_numbers = #tpu.dot_dimension_numbers<[1], [0], [0], [1], [0, 0, 1, 1], [], []>} : vector<32x32xbf16>, vector<32x256xbf16>, vector<32x256xf32> -> vector<32x256xf32>
    %c0_16 = arith.constant 0 : index
    %c0_17 = arith.constant 0 : index
    %c0_18 = arith.constant 0 : index
    %27 = vector.load %arg6[%c0_16, %c0_17, %c0_18] : memref<2x32x1xf32, #tpu.memory_space<vmem>>, vector<1x32x1xf32>
    %28 = vector.shape_cast %27 : vector<1x32x1xf32> to vector<32x1xf32>
    %29 = vector.broadcast %28 : vector<32x1xf32> to vector<32x256xf32>
    %30 = arith.addf %26, %29 : vector<32x256xf32>
    %cst_19 = arith.constant 0.000000e+00 : f32
    %31 = vector.broadcast %cst_19 : f32 to vector<32x256xf32>
    %32 = arith.maximumf %30, %31 : vector<32x256xf32>
    %c1_20 = arith.constant 1 : index
    %c0_21 = arith.constant 0 : index
    %c0_22 = arith.constant 0 : index
    %33 = vector.load %arg5[%c1_20, %c0_21, %c0_22] : memref<2x32x32xbf16, #tpu.memory_space<vmem>>, vector<1x32x32xbf16>
    %34 = vector.shape_cast %33 : vector<1x32x32xbf16> to vector<32x32xbf16>
    %35 = arith.truncf %32 : vector<32x256xf32> to vector<32x256xbf16>
    %cst_23 = arith.constant dense<0.000000e+00> : vector<32x256xf32>
    %36 = tpu.matmul %34, %35, %cst_23 {dimension_numbers = #tpu.dot_dimension_numbers<[1], [0], [0], [1], [0, 0, 1, 1], [], []>} : vector<32x32xbf16>, vector<32x256xbf16>, vector<32x256xf32> -> vector<32x256xf32>
    %c1_24 = arith.constant 1 : index
    %c0_25 = arith.constant 0 : index
    %c0_26 = arith.constant 0 : index
    %37 = vector.load %arg6[%c1_24, %c0_25, %c0_26] : memref<2x32x1xf32, #tpu.memory_space<vmem>>, vector<1x32x1xf32>
    %38 = vector.shape_cast %37 : vector<1x32x1xf32> to vector<32x1xf32>
    %39 = vector.broadcast %38 : vector<32x1xf32> to vector<32x256xf32>
    %40 = arith.addf %36, %39 : vector<32x256xf32>
    %cst_27 = arith.constant 0.000000e+00 : f32
    %41 = vector.broadcast %cst_27 : f32 to vector<32x256xf32>
    %42 = arith.maximumf %40, %41 : vector<32x256xf32>
    %c0_28 = arith.constant 0 : index
    %c0_29 = arith.constant 0 : index
    %43 = vector.load %arg7[%c0_28, %c0_29] : memref<3x32xbf16, #tpu.memory_space<vmem>>, vector<3x32xbf16>
    %44 = arith.truncf %42 : vector<32x256xf32> to vector<32x256xbf16>
    %cst_30 = arith.constant dense<0.000000e+00> : vector<3x256xf32>
    %45 = tpu.matmul %43, %44, %cst_30 {dimension_numbers = #tpu.dot_dimension_numbers<[1], [0], [0], [1], [0, 0, 1, 1], [], []>} : vector<3x32xbf16>, vector<32x256xbf16>, vector<3x256xf32> -> vector<3x256xf32>
    %c0_31 = arith.constant 0 : index
    %c0_32 = arith.constant 0 : index
    %46 = vector.load %arg8[%c0_31, %c0_32] : memref<3x1xf32, #tpu.memory_space<vmem>>, vector<3x1xf32>
    %47 = vector.broadcast %46 : vector<3x1xf32> to vector<3x256xf32>
    %48 = arith.addf %45, %47 : vector<3x256xf32>
    %49 = arith.negf %48 : vector<3x256xf32>
    %50 = math.exp %49 : vector<3x256xf32>
    %cst_33 = arith.constant 1.000000e+00 : f32
    %51 = vector.broadcast %cst_33 : f32 to vector<3x256xf32>
    %52 = arith.addf %51, %50 : vector<3x256xf32>
    %53 = arith.divf %51, %52 : vector<3x256xf32>
    %c0_34 = arith.constant 0 : index
    %c0_35 = arith.constant 0 : index
    %54 = vector.load %arg9[%c0_34, %c0_35] : memref<3x256xf32, #tpu.memory_space<vmem>>, vector<3x256xf32>
    tpu.vector_store %arg9[%c0_34, %c0_35], %53 {strides = array<i32>} : memref<3x256xf32, #tpu.memory_space<vmem>>, vector<3x256xf32>,
    return
  }
  func.func @transform_0(%arg0: i32) -> (i32, i32) {
    %c0_i32 = arith.constant 0 : i32
    %c0_i32_0 = arith.constant 0 : i32
    return %c0_i32, %arg0 : i32, i32
  }
  func.func @transform_1(%arg0: i32) -> (i32, i32) {
    %c0_i32 = arith.constant 0 : i32
    %c0_i32_0 = arith.constant 0 : i32
    %c0_i32_1 = arith.constant 0 : i32
    return %c0_i32, %c0_i32_0 : i32, i32
  }
  func.func @transform_2(%arg0: i32) -> (i32, i32) {
    %c0_i32 = arith.constant 0 : i32
    %c0_i32_0 = arith.constant 0 : i32
    %c0_i32_1 = arith.constant 0 : i32
    return %c0_i32, %c0_i32_0 : i32, i32
  }
  func.func @transform_3(%arg0: i32) -> (i32, i32) {
    %c0_i32 = arith.constant 0 : i32
    %c0_i32_0 = arith.constant 0 : i32
    %c0_i32_1 = arith.constant 0 : i32
    return %c0_i32, %c0_i32_0 : i32, i32
  }
  func.func @transform_4(%arg0: i32) -> (i32, i32, i32) {
    %c0_i32 = arith.constant 0 : i32
    %c0_i32_0 = arith.constant 0 : i32
    %c0_i32_1 = arith.constant 0 : i32
    %c0_i32_2 = arith.constant 0 : i32
    return %c0_i32, %c0_i32_0, %c0_i32_1 : i32, i32, i32
  }
  func.func @transform_5(%arg0: i32) -> (i32, i32, i32) {
    %c0_i32 = arith.constant 0 : i32
    %c0_i32_0 = arith.constant 0 : i32
    %c0_i32_1 = arith.constant 0 : i32
    %c0_i32_2 = arith.constant 0 : i32
    return %c0_i32, %c0_i32_0, %c0_i32_1 : i32, i32, i32
  }
  func.func @transform_6(%arg0: i32) -> (i32, i32) {
    %c0_i32 = arith.constant 0 : i32
    %c0_i32_0 = arith.constant 0 : i32
    %c0_i32_1 = arith.constant 0 : i32
    return %c0_i32, %c0_i32_0 : i32, i32
  }
  func.func @transform_7(%arg0: i32) -> (i32, i32) {
    %c0_i32 = arith.constant 0 : i32
    %c0_i32_0 = arith.constant 0 : i32
    %c0_i32_1 = arith.constant 0 : i32
    return %c0_i32, %c0_i32_0 : i32, i32
  }
  func.func @transform_8(%arg0: i32) -> (i32, i32) {
    %c0_i32 = arith.constant 0 : i32
    %c0_i32_0 = arith.constant 0 : i32
    return %c0_i32, %arg0 : i32, i32
  }
}

</mosaic_0001>

<llo_original>
// kernel: tpu_custom_call.1
$region0: #{tpu_custom_call.1}
  #allocation0 [shape = 'u32[]', space=smem, size = 0x4, offset = 0x4, fixed_abs, tag = 'smem constant byte address 0x4 - core index']
  #allocation1 [shape = 'u32[144,128]{1,0:T(1,128)}', space=vmem, size = 0x12000, scoped, tag = 'internal scratch']
  %s0 = inlined_call_operand.vmem [shape: f32[2,512], index: 0, kind: input, shape index: {}]
  %s1 = inlined_call_operand.vmem [shape: f32[32,3], index: 1, kind: input, shape index: {}]
  %s2 = inlined_call_operand.vmem [shape: bf16[32,32], index: 2, kind: input, shape index: {}]
  %s3 = inlined_call_operand.vmem [shape: f32[32,1], index: 3, kind: input, shape index: {}]
  %s4 = inlined_call_operand.vmem [shape: bf16[2,32,32], index: 4, kind: input, shape index: {}]
  %s5 = inlined_call_operand.vmem [shape: f32[2,32,1], index: 5, kind: input, shape index: {}]
  %s6 = inlined_call_operand.vmem [shape: bf16[3,32], index: 6, kind: input, shape index: {}]
  %s7 = inlined_call_operand.vmem [shape: f32[3,1], index: 7, kind: input, shape index: {}]
  %s8 = inlined_call_operand.hbm [shape: f32[3,512], index: 8, kind: output, shape index: {}]
  %s9 = sld [smem:[#allocation0]]
  $region65: #{tpu_custom_call.1} parent=0
    _
  %s11 = ssub.s32 1, %s9
  %s12 = scalar_select 0, %s11, %s9
  $region1: #{tpu_custom_call.1} parent=0
    #allocation2 [shape = 'u8[8192]{0}', space=vmem, size = 0x2000, scoped, tag = 'output window, operand 0']
    #allocation3 [shape = 's32[2]{0}', space=sflag, size = 0x8, scoped, tag = 'scoped memory for tpu_custom_call.1']
    %13 = vsyncpa [#allocation3], 0
    %s14 = scalar_lea.sflag [#allocation3], 1
    %15 = vsyncpa %s14, 0
    loop: start=0, step=1, limit=4
    $region2: #{tpu_custom_call.1} parent=1 // loop_pre_header
      _
    $region3: #{tpu_custom_call.1} parent=1 // loop_header
      %s17 = sphi 0, %s21
      %p18 = scmp.ge.s32.totalorder %s17, 4
      %s27 = sphi 0, %s29
      %s30 = sphi 0, %s27
      %s31 = sphi 0, %s30
      %s47 = sphi 0, %s31
      %s51 = sphi 0, %s51
      %s53 = sphi 0, %s51
      %s54 = sphi 0, %s53
      %s68 = sphi 0, %s54
      %s72 = sphi 0, %s72
      %s74 = sphi 0, %s72
      %s75 = sphi 0, %s74
      %s89 = sphi 0, %s75
      %s93 = sphi 0, %s93
      %s95 = sphi 0, %s93
      %s96 = sphi 0, %s95
      %s110 = sphi 0, %s96
      %s114 = sphi 0, %s114
      %s116 = sphi 0, %s114
      %s117 = sphi 0, %s116
      %s131 = sphi 0, %s117
      %s135 = sphi 0, %s135
      %s137 = sphi 0, %s135
      %s138 = sphi 0, %s137
      %s152 = sphi 0, %s138
      %s156 = sphi 0, %s156
      %s158 = sphi 0, %s156
      %s159 = sphi 0, %s158
      %s173 = sphi 0, %s159
      %s177 = sphi 0, %s177
      %s179 = sphi 0, %s177
      %s180 = sphi 0, %s179
      %s194 = sphi 0, %s180
      %s200 = sphi 0, %s202
      %s203 = sphi 0, %s200
      %s204 = sphi 0, %s203
      %s220 = sphi 0, %s204
    $region4: #{tpu_custom_call.1} parent=1 // loop_header_branch
      %20 = sbr.rel (%p18) target = $region8
    $region5: #{tpu_custom_call.1} parent=1 // loop_body
      %s22 = ssub.s32 %s17, 1
      %s23 = ssub.s32 %s17, 2
      %s24 = sadd.s32 %s17, 1
      %s25 = ssub.s32 %s17, %s24
      %p26 = scmp.eq.s32.totalorder %s25, 0
      %s28 = sadd.s32 %s27, 1
      %s29 = scalar_select %p26, %s27, %s28
      %p32 = pneg %p26
      %p33 = scmp.eq.s32.totalorder %s17, 1
      %p34 = por %p32, %p33
      %p35 = scmp.ne.s32.totalorder %s27, %s30
      %p36 = scmp.eq.s32.totalorder %s17, 0
      %p37 = por %p35, %p36
      %p38 = scmp.ne.s32.totalorder %s27, %s30
      %p39 = scmp.eq.s32.totalorder %s22, 1
      %p40 = por %p38, %p39
      %p41 = scmp.ne.s32.totalorder %s30, %s31
      %p42 = scmp.eq.s32.totalorder %s22, 0
      %p43 = por %p41, %p42
      %p44 = scmp.ne.s32.totalorder %s30, %s31
      %p45 = scmp.eq.s32.totalorder %s23, 1
      %p46 = por %p44, %p45
      %p48 = scmp.ne.s32.totalorder %s31, %s47
      %p49 = scmp.eq.s32.totalorder %s23, 0
      %p50 = por %p48, %p49
      %s52 = sadd.s32 %s51, 1
      %p55 = scmp.eq.s32.totalorder %s17, 1
      %p56 = scmp.ne.s32.totalorder %s51, %s53
      %p57 = scmp.eq.s32.totalorder %s17, 0
      %p58 = por %p56, %p57
      %p59 = scmp.ne.s32.totalorder %s51, %s53
      %p60 = scmp.eq.s32.totalorder %s22, 1
      %p61 = por %p59, %p60
      %p62 = scmp.ne.s32.totalorder %s53, %s54
      %p63 = scmp.eq.s32.totalorder %s22, 0
      %p64 = por %p62, %p63
      %p65 = scmp.ne.s32.totalorder %s53, %s54
      %p66 = scmp.eq.s32.totalorder %s23, 1
      %p67 = por %p65, %p66
      %p69 = scmp.ne.s32.totalorder %s54, %s68
      %p70 = scmp.eq.s32.totalorder %s23, 0
      %p71 = por %p69, %p70
      %s73 = sadd.s32 %s72, 1
      %p76 = scmp.eq.s32.totalorder %s17, 1
      %p77 = scmp.ne.s32.totalorder %s72, %s74
      %p78 = scmp.eq.s32.totalorder %s17, 0
      %p79 = por %p77, %p78
      %p80 = scmp.ne.s32.totalorder %s72, %s74
      %p81 = scmp.eq.s32.totalorder %s22, 1
      %p82 = por %p80, %p81
      %p83 = scmp.ne.s32.totalorder %s74, %s75
      %p84 = scmp.eq.s32.totalorder %s22, 0
      %p85 = por %p83, %p84
      %p86 = scmp.ne.s32.totalorder %s74, %s75
      %p87 = scmp.eq.s32.totalorder %s23, 1
      %p88 = por %p86, %p87
      %p90 = scmp.ne.s32.totalorder %s75, %s89
      %p91 = scmp.eq.s32.totalorder %s23, 0
      %p92 = por %p90, %p91
      %s94 = sadd.s32 %s93, 1
      %p97 = scmp.eq.s32.totalorder %s17, 1
      %p98 = scmp.ne.s32.totalorder %s93, %s95
      %p99 = scmp.eq.s32.totalorder %s17, 0
      %p100 = por %p98, %p99
      %p101 = scmp.ne.s32.totalorder %s93, %s95
      %p102 = scmp.eq.s32.totalorder %s22, 1
      %p103 = por %p101, %p102
      %p104 = scmp.ne.s32.totalorder %s95, %s96
      %p105 = scmp.eq.s32.totalorder %s22, 0
      %p106 = por %p104, %p105
      %p107 = scmp.ne.s32.totalorder %s95, %s96
      %p108 = scmp.eq.s32.totalorder %s23, 1
      %p109 = por %p107, %p108
      %p111 = scmp.ne.s32.totalorder %s96, %s110
      %p112 = scmp.eq.s32.totalorder %s23, 0
      %p113 = por %p111, %p112
      %s115 = sadd.s32 %s114, 1
      %p118 = scmp.eq.s32.totalorder %s17, 1
      %p119 = scmp.ne.s32.totalorder %s114, %s116
      %p120 = scmp.eq.s32.totalorder %s17, 0
      %p121 = por %p119, %p120
      %p122 = scmp.ne.s32.totalorder %s114, %s116
      %p123 = scmp.eq.s32.totalorder %s22, 1
      %p124 = por %p122, %p123
      %p125 = scmp.ne.s32.totalorder %s116, %s117
      %p126 = scmp.eq.s32.totalorder %s22, 0
      %p127 = por %p125, %p126
      %p128 = scmp.ne.s32.totalorder %s116, %s117
      %p129 = scmp.eq.s32.totalorder %s23, 1
      %p130 = por %p128, %p129
      %p132 = scmp.ne.s32.totalorder %s117, %s131
      %p133 = scmp.eq.s32.totalorder %s23, 0
      %p134 = por %p132, %p133
      %s136 = sadd.s32 %s135, 1
      %p139 = scmp.eq.s32.totalorder %s17, 1
      %p140 = scmp.ne.s32.totalorder %s135, %s137
      %p141 = scmp.eq.s32.totalorder %s17, 0
      %p142 = por %p140, %p141
      %p143 = scmp.ne.s32.totalorder %s135, %s137
      %p144 = scmp.eq.s32.totalorder %s22, 1
      %p145 = por %p143, %p144
      %p146 = scmp.ne.s32.totalorder %s137, %s138
      %p147 = scmp.eq.s32.totalorder %s22, 0
      %p148 = por %p146, %p147
      %p149 = scmp.ne.s32.totalorder %s137, %s138
      %p150 = scmp.eq.s32.totalorder %s23, 1
      %p151 = por %p149, %p150
      %p153 = scmp.ne.s32.totalorder %s138, %s152
      %p154 = scmp.eq.s32.totalorder %s23, 0
      %p155 = por %p153, %p154
      %s157 = sadd.s32 %s156, 1
      %p160 = scmp.eq.s32.totalorder %s17, 1
      %p161 = scmp.ne.s32.totalorder %s156, %s158
      %p162 = scmp.eq.s32.totalorder %s17, 0
      %p163 = por %p161, %p162
      %p164 = scmp.ne.s32.totalorder %s156, %s158
      %p165 = scmp.eq.s32.totalorder %s22, 1
      %p166 = por %p164, %p165
      %p167 = scmp.ne.s32.totalorder %s158, %s159
      %p168 = scmp.eq.s32.totalorder %s22, 0
      %p169 = por %p167, %p168
      %p170 = scmp.ne.s32.totalorder %s158, %s159
      %p171 = scmp.eq.s32.totalorder %s23, 1
      %p172 = por %p170, %p171
      %p174 = scmp.ne.s32.totalorder %s159, %s173
      %p175 = scmp.eq.s32.totalorder %s23, 0
      %p176 = por %p174, %p175
      %s178 = sadd.s32 %s177, 1
      %p181 = scmp.eq.s32.totalorder %s17, 1
      %p182 = scmp.ne.s32.totalorder %s177, %s179
      %p183 = scmp.eq.s32.totalorder %s17, 0
      %p184 = por %p182, %p183
      %p185 = scmp.ne.s32.totalorder %s177, %s179
      %p186 = scmp.eq.s32.totalorder %s22, 1
      %p187 = por %p185, %p186
      %p188 = scmp.ne.s32.totalorder %s179, %s180
      %p189 = scmp.eq.s32.totalorder %s22, 0
      %p190 = por %p188, %p189
      %p191 = scmp.ne.s32.totalorder %s179, %s180
      %p192 = scmp.eq.s32.totalorder %s23, 1
      %p193 = por %p191, %p192
      %p195 = scmp.ne.s32.totalorder %s180, %s194
      %p196 = scmp.eq.s32.totalorder %s23, 0
      %p197 = por %p195, %p196
      %s198 = ssub.s32 %s17, %s24
      %p199 = scmp.eq.s32.totalorder %s198, 0
      %s201 = sadd.s32 %s200, 1
      %s202 = scalar_select %p199, %s200, %s201
      %p205 = pneg %p199
      %p206 = scmp.eq.s32.totalorder %s17, 1
      %p207 = por %p205, %p206
      %p208 = scmp.ne.s32.totalorder %s200, %s203
      %p209 = scmp.eq.s32.totalorder %s17, 0
      %p210 = por %p208, %p209
      %p211 = scmp.ne.s32.totalorder %s200, %s203
      %p212 = scmp.eq.s32.totalorder %s22, 1
      %p213 = por %p211, %p212
      %p214 = scmp.ne.s32.totalorder %s203, %s204
      %p215 = scmp.eq.s32.totalorder %s22, 0
      %p216 = por %p214, %p215
      %p217 = scmp.ne.s32.totalorder %s203, %s204
      %p218 = scmp.eq.s32.totalorder %s23, 1
      %p219 = por %p217, %p218
      %p221 = scmp.ne.s32.totalorder %s204, %s220
      %p222 = scmp.eq.s32.totalorder %s23, 0
      %p223 = por %p221, %p222
      %p224 = scmp.le.s32.totalorder 1, %s17
      %p225 = scmp.lt.s32.totalorder %s17, 3
      %p226 = pnand %p224, %p225
      %p227 = pneg %p226
      // Predicated region
      $region9: #{tpu_custom_call.1} parent=5 // pred_check
        _
      $region10: #{tpu_custom_call.1} parent=5 // pred_check_branch
        %229 = sbr.rel (%p226) target = $region12
      $region11: #{tpu_custom_call.1} parent=5 // pred_region
        %s230 = ssub.s32 %s17, 1
        // Predicated region
        $region13: #{tpu_custom_call.1} parent=11 // pred_check
          %p231 = pneg %p64
        $region14: #{tpu_custom_call.1} parent=11 // pred_check_branch
          %233 = sbr.rel (%p231) target = $region16
        $region15: #{tpu_custom_call.1} parent=11 // pred_region
          _
        $region16: #{tpu_custom_call.1} parent=11 // pred_fallthru
          _
        // Predicated region
        $region17: #{tpu_custom_call.1} parent=11 // pred_check
          %p234 = pneg %p85
        $region18: #{tpu_custom_call.1} parent=11 // pred_check_branch
          %236 = sbr.rel (%p234) target = $region20
        $region19: #{tpu_custom_call.1} parent=11 // pred_region
          _
        $region20: #{tpu_custom_call.1} parent=11 // pred_fallthru
          _
        // Predicated region
        $region21: #{tpu_custom_call.1} parent=11 // pred_check
          %p237 = pneg %p106
        $region22: #{tpu_custom_call.1} parent=11 // pred_check_branch
          %239 = sbr.rel (%p237) target = $region24
        $region23: #{tpu_custom_call.1} parent=11 // pred_region
          _
        $region24: #{tpu_custom_call.1} parent=11 // pred_fallthru
          _
        // Predicated region
        $region25: #{tpu_custom_call.1} parent=11 // pred_check
          %p240 = pneg %p127
        $region26: #{tpu_custom_call.1} parent=11 // pred_check_branch
          %242 = sbr.rel (%p240) target = $region28
        $region27: #{tpu_custom_call.1} parent=11 // pred_region
          _
        $region28: #{tpu_custom_call.1} parent=11 // pred_fallthru
          _
        // Predicated region
        $region29: #{tpu_custom_call.1} parent=11 // pred_check
          %p243 = pneg %p148
        $region30: #{tpu_custom_call.1} parent=11 // pred_check_branch
          %245 = sbr.rel (%p243) target = $region32
        $region31: #{tpu_custom_call.1} parent=11 // pred_region
          _
        $region32: #{tpu_custom_call.1} parent=11 // pred_fallthru
          _
        // Predicated region
        $region33: #{tpu_custom_call.1} parent=11 // pred_check
          %p246 = pneg %p169
        $region34: #{tpu_custom_call.1} parent=11 // pred_check_branch
          %248 = sbr.rel (%p246) target = $region36
        $region35: #{tpu_custom_call.1} parent=11 // pred_region
          _
        $region36: #{tpu_custom_call.1} parent=11 // pred_fallthru
          _
        // Predicated region
        $region37: #{tpu_custom_call.1} parent=11 // pred_check
          %p249 = pneg %p190
        $region38: #{tpu_custom_call.1} parent=11 // pred_check_branch
          %251 = sbr.rel (%p249) target = $region40
        $region39: #{tpu_custom_call.1} parent=11 // pred_region
          _
        $region40: #{tpu_custom_call.1} parent=11 // pred_fallthru
          _
      $region12: #{tpu_custom_call.1} parent=5 // pred_fallthru
        _
      %p252 = scmp.lt.s32.totalorder %s17, 2
      // Predicated region
      $region41: #{tpu_custom_call.1} parent=5 // pred_check
        %p253 = pneg %p252
      $region42: #{tpu_custom_call.1} parent=5 // pred_check_branch
        %255 = sbr.rel (%p253) target = $region44
      $region43: #{tpu_custom_call.1} parent=5 // pred_region
        // Predicated region
        $region45: #{tpu_custom_call.1} parent=43 // pred_check
          %p256 = pneg %p37
        $region46: #{tpu_custom_call.1} parent=43 // pred_check_branch
          %258 = sbr.rel (%p256) target = $region48
        $region47: #{tpu_custom_call.1} parent=43 // pred_region
          %s259 = smul.u32 2, %s17
          %p260 = scmp.lt.s32.totalorder %s259, 3
          %s261 = scalar_select %p260, %s259, 3
          %s262 = smul.addr %s261, 2
          %s263 = scalar_lea.vmem %s0, %s262
          %s264 = smul.u32 2, %s17
        $region48: #{tpu_custom_call.1} parent=43 // pred_fallthru
          _
      $region44: #{tpu_custom_call.1} parent=5 // pred_fallthru
        _
      %p265 = scmp.le.s32.totalorder 1, %s17
      %p266 = scmp.lt.s32.totalorder %s17, 3
      %p267 = pnand %p265, %p266
      %p268 = pneg %p267
      // Predicated region
      $region49: #{tpu_custom_call.1} parent=5 // pred_check
        _
      $region50: #{tpu_custom_call.1} parent=5 // pred_check_branch
        %270 = sbr.rel (%p267) target = $region52
      $region51: #{tpu_custom_call.1} parent=5 // pred_region
        %s271 = ssub.s32 %s17, 1
        %s272 = smul.u32 2, %s22
        %p273 = scmp.lt.s32.totalorder %s272, 3
        %s274 = scalar_select %p273, %s272, 3
        %s275 = smul.addr %s274, 2
        %s276 = scalar_lea.vmem %s0, %s275
        %p277 = pneg %p43
        %p278 = pneg %p40
        %p279 = pneg %p64
        %p280 = pneg %p61
        %p281 = pneg %p85
        %p282 = pneg %p82
        %p283 = pneg %p106
        %p284 = pneg %p103
        %p285 = pneg %p127
        %p286 = pneg %p124
        %p287 = pneg %p148
        %p288 = pneg %p145
        %p289 = pneg %p169
        %p290 = pneg %p166
        %p291 = pneg %p190
        %p292 = pneg %p187
        %p293 = pneg %p216
        %p294 = pneg %p213
        %s295 = sand.u32 %s203, 1
        %s296 = scalar_lea.sflag [#allocation3], %s295
        %s297 = sand.u32 %s203, 1
        %s298 = smul.addr %s297, 8
        %s299 = scalar_lea.vmem [#allocation2], %s298
        %s300 = smul.u32 2, %s22
        %p301 = scmp.lt.s32.totalorder %s300, 3
        %s302 = scalar_select %p301, %s300, 3
        %s303 = smul.addr %s302, 2
        %s304 = scalar_lea.vmem %s0, %s303
        %s305 = smul.u32 2, %s22
        %s306 = smul.u32 2, %s22
        %v308 = vld [vmem:[%s304] ss:$2 sm:$0x3]
        %s309 = scalar_lea.vmem %s304, 1
        %v310 = vld [vmem:[%s309] ss:$2 sm:$0x3]
        %v311 = vld [vmem:[%s1] sm:$0xff]
        %v312 = vld [vmem:[%s1 + $0x8] sm:$0xff]
        %v313 = vld [vmem:[%s1 + $0x10] sm:$0xff]
        %v314 = vld [vmem:[%s1 + $0x18] sm:$0xff]
        %316 = vset.pattern.permute.xlu0 0
        %317 = vperm.xlu0 %316, %v311
        %v318 = vpop.permute.xlu0 %317
        %321 = vset.pattern.permute.xlu0 0
        %322 = vperm.xlu0 %321, %v312
        %v323 = vpop.permute.xlu0 %322
        %326 = vset.pattern.permute.xlu0 0
        %327 = vperm.xlu0 %326, %v313
        %v328 = vpop.permute.xlu0 %327
        %331 = vset.pattern.permute.xlu0 0
        %332 = vperm.xlu0 %331, %v314
        %v333 = vpop.permute.xlu0 %332
        %v336 = vlaneseq
        %v337 = vshrl.u32 %v336, 7
        %v338 = vsub.s32 0, %v337
        %v339 = vrot.slane %v308, %v338
        %v340 = vlaneseq
        %v341 = vshrl.u32 %v340, 7
        %v342 = vsub.s32 1, %v341
        %v343 = vrot.slane %v308, %v342
        %v346 = vmul.f32 %v318, %v339
        %v347 = vmul.f32 %v318, %v343
        %v348 = vmul.f32 %v323, %v339
        %v349 = vmul.f32 %v323, %v343
        %v350 = vmul.f32 %v328, %v339
        %v351 = vmul.f32 %v328, %v343
        %v352 = vmul.f32 %v333, %v339
        %v353 = vmul.f32 %v333, %v343
        %354 = vset.pattern.permute.xlu0 1
        %355 = vperm.xlu0 %354, %v311
        %v356 = vpop.permute.xlu0 %355
        %358 = vset.pattern.permute.xlu0 1
        %359 = vperm.xlu0 %358, %v312
        %v360 = vpop.permute.xlu0 %359
        %362 = vset.pattern.permute.xlu0 1
        %363 = vperm.xlu0 %362, %v313
        %v364 = vpop.permute.xlu0 %363
        %366 = vset.pattern.permute.xlu0 1
        %367 = vperm.xlu0 %366, %v314
        %v368 = vpop.permute.xlu0 %367
        %v371 = vlaneseq
        %v372 = vshrl.u32 %v371, 7
        %v373 = vsub.s32 0, %v372
        %v374 = vrot.slane %v310, %v373
        %v375 = vlaneseq
        %v376 = vshrl.u32 %v375, 7
        %v377 = vsub.s32 1, %v376
        %v378 = vrot.slane %v310, %v377
        %v381 = vmul.f32 %v356, %v374
        %v382 = vmul.f32 %v356, %v378
        %v383 = vmul.f32 %v360, %v374
        %v384 = vmul.f32 %v360, %v378
        %v385 = vmul.f32 %v364, %v374
        %v386 = vmul.f32 %v364, %v378
        %v387 = vmul.f32 %v368, %v374
        %v388 = vmul.f32 %v368, %v378
        %v389 = vadd.f32 %v346, %v381
        %v390 = vadd.f32 %v347, %v382
        %v391 = vadd.f32 %v348, %v383
        %v392 = vadd.f32 %v349, %v384
        %v393 = vadd.f32 %v350, %v385
        %v394 = vadd.f32 %v351, %v386
        %v395 = vadd.f32 %v352, %v387
        %v396 = vadd.f32 %v353, %v388
        %397 = vset.pattern.permute.xlu0 2
        %398 = vperm.xlu0 %397, %v311
        %v399 = vpop.permute.xlu0 %398
        %401 = vset.pattern.permute.xlu0 2
        %402 = vperm.xlu0 %401, %v312
        %v403 = vpop.permute.xlu0 %402
        %405 = vset.pattern.permute.xlu0 2
        %406 = vperm.xlu0 %405, %v313
        %v407 = vpop.permute.xlu0 %406
        %409 = vset.pattern.permute.xlu0 2
        %410 = vperm.xlu0 %409, %v314
        %v411 = vpop.permute.xlu0 %410
        %v413 = vadd.f32 %v389, %v399
        %v414 = vadd.f32 %v390, %v399
        %v415 = vadd.f32 %v391, %v403
        %v416 = vadd.f32 %v392, %v403
        %v417 = vadd.f32 %v393, %v407
        %v418 = vadd.f32 %v394, %v407
        %v419 = vadd.f32 %v395, %v411
        %v420 = vadd.f32 %v396, %v411
        %v421 = vand.u32 2147483647, %v413
        %vm422 = vcmp.le.f32.partialorder %v421, 0.7853982
        %vm423 = vcmp.lt.s32.totalorder %v413, 0
        %v424 = vand.u32 %v413, 2139095040
        %v425 = vshrl.u32 %v424, 23
        %v426 = vsub.s32 %v425, 127
        %v427 = vand.u32 2147483647, %v413
        %v428 = vand.u32 %v427, 8388607
        %v429 = vor.u32 %v428, 8388608
        %v430 = vsub.s32 0, %v429
        %v431 = vadd.s32 %v426, 1
        %vm432 = vcmp.gt.s32.totalorder %v431, 0
        %v433 = vsel %vm432, %v431, 0
        %v434 = vshrl.u32 %v433, 5
        %v435 = vand.u32 %v433, 31
        %v436 = vsub.s32 32, %v435
        %v437 = vshrl.u32 683565275, %v436
        %v438 = vshll.u32 683565275, %v435
        %v439 = vshrl.u32 2475754826, %v436
        %v440 = vor.u32 %v438, %v439
        %v441 = vshll.u32 2475754826, %v435
        %v442 = vshrl.u32 2131351028, %v436
        %v443 = vor.u32 %v441, %v442
        %v444 = vshll.u32 2131351028, %v435
        %v445 = vshrl.u32 2102212464, %v436
        %v446 = vor.u32 %v444, %v445
        %v447 = vshll.u32 2102212464, %v435
        %v448 = vshrl.u32 920167782, %v436
        %v449 = vor.u32 %v447, %v448
        %v450 = vshll.u32 920167782, %v435
        %v451 = vshrl.u32 1326507024, %v436
        %v452 = vor.u32 %v450, %v451
        %vm453 = vcmp.lt.s32.totalorder %v434, 1
        %vm454 = vcmp.lt.s32.totalorder %v434, 2
        %vm455 = vcmp.lt.s32.totalorder %v434, 3
        %vm456 = vcmp.lt.s32.totalorder %v434, 4
        %v457 = vsel %vm453, %v437, %v440
        %v458 = vsel %vm456, %v446, 2102212464
        %v459 = vsel %vm455, %v443, %v458
        %v460 = vsel %vm454, %v457, %v459
        %v461 = vsel %vm453, %v440, %v443
        %v462 = vsel %vm456, %v449, 920167782
        %v463 = vsel %vm455, %v446, %v462
        %v464 = vsel %vm454, %v461, %v463
        %v465 = vsel %vm453, %v443, %v446
        %v466 = vsel %vm456, %v452, 1326507024
        %v467 = vsel %vm455, %v449, %v466
        %v468 = vsel %vm454, %v465, %v467
        %v469 = vshll.u32 %v429, 8
        %v470 = vmul.u32.u64.compose %v469, %v468
        %v471 = vextract.low.u32 %v470
        %v472 = vextract.high.u32 %v470
        %v473 = vmul.u32.u64.compose %v469, %v464
        %v474 = vextract.low.u32 %v473
        %v475 = vextract.high.u32 %v473
        %v476 = vmul.u32 %v469, %v460
        %v477 = vadd.s32 %v472, %v474
        %vm478 = vc.u32 %v472, %v474
        %v479 = vadd.s32 %v475, 1
        %v480 = vsel %vm478, %v479, %v475
        %v481 = vadd.s32 %v476, %v480
        %v482 = vadd.s32 %v481, 536870912
        %v483 = vshrl.u32 %v482, 30
        %v484 = vshll.u32 %v483, 30
        %v485 = vsub.s32 %v481, %v484
        %vm486 = vcmp.lt.s32.totalorder %v485, 0
        %v487 = vsub.s32 0, %v485
        %v488 = vsel %vm486, %v487, %v485
        %v489 = vclz %v488
        %v490 = vsub.s32 %v489, 2
        %vm491 = vcmp.gt.s32.totalorder 0, %v490
        %v492 = vsel %vm491, 0, %v490
        %v493 = vsub.s32 32, %v492
        %v494 = vshll.u32 %v485, %v492
        %v495 = vshrl.u32 %v477, %v493
        %v496 = vor.u32 %v494, %v495
        %v497 = vsub.s32 4294967266, %v492
        %v498 = vadd.s32 %v497, 127
        %v499 = vshll.u32 %v498, 23
        %v500 = vor.u32 4788187, %v499
        %v501 = vand.u32 2147483647, %v500
        %v503 = vcvt.s32.f32 %v496
        %v504 = vmul.f32 %v503, %v501
        %v505 = vxor.u32 %v504, 2147483648
        %v506 = vsel %vm423, %v505, %v504
        %v507 = vsub.s32 4, %v483
        %v508 = vsel %vm423, %v507, %v483
        %v509 = vsel %vm422, %v413, %v506
        %v510 = vsel %vm422, 0, %v508
        %v511 = vcosq.f32.pop %v509
        %v512 = vsinq.f32.pop %v509
        %vm513 = vweird.f32 %v413
        %v514 = vadd.s32 %v510, 3
        %v515 = vand.u32 %v514, 3
        %vm516 = vcmp.lt.s32.totalorder %v515, 2
        %vm517 = vcmp.eq.s32.totalorder %v515, 0
        %v518 = vxor.u32 %v512, 2147483648
        %v519 = vsel %vm517, %v511, %v518
        %vm520 = vcmp.eq.s32.totalorder %v515, 2
        %v521 = vxor.u32 %v511, 2147483648
        %v522 = vsel %vm520, %v521, %v512
        %v523 = vsel %vm516, %v519, %v522
        %v524 = vsel %vm513, nan, %v523
        %v525 = vand.u32 2147483647, %v414
        %vm526 = vcmp.le.f32.partialorder %v525, 0.7853982
        %vm527 = vcmp.lt.s32.totalorder %v414, 0
        %v528 = vand.u32 %v414, 2139095040
        %v529 = vshrl.u32 %v528, 23
        %v530 = vsub.s32 %v529, 127
        %v531 = vand.u32 2147483647, %v414
        %v532 = vand.u32 %v531, 8388607
        %v533 = vor.u32 %v532, 8388608
        %v534 = vsub.s32 0, %v533
        %v535 = vadd.s32 %v530, 1
        %vm536 = vcmp.gt.s32.totalorder %v535, 0
        %v537 = vsel %vm536, %v535, 0
        %v538 = vshrl.u32 %v537, 5
        %v539 = vand.u32 %v537, 31
        %v540 = vsub.s32 32, %v539
        %v541 = vshrl.u32 683565275, %v540
        %v542 = vshll.u32 683565275, %v539
        %v543 = vshrl.u32 2475754826, %v540
        %v544 = vor.u32 %v542, %v543
        %v545 = vshll.u32 2475754826, %v539
        %v546 = vshrl.u32 2131351028, %v540
        %v547 = vor.u32 %v545, %v546
        %v548 = vshll.u32 2131351028, %v539
        %v549 = vshrl.u32 2102212464, %v540
        %v550 = vor.u32 %v548, %v549
        %v551 = vshll.u32 2102212464, %v539
        %v552 = vshrl.u32 920167782, %v540
        %v553 = vor.u32 %v551, %v552
        %v554 = vshll.u32 920167782, %v539
        %v555 = vshrl.u32 1326507024, %v540
        %v556 = vor.u32 %v554, %v555
        %vm557 = vcmp.lt.s32.totalorder %v538, 1
        %vm558 = vcmp.lt.s32.totalorder %v538, 2
        %vm559 = vcmp.lt.s32.totalorder %v538, 3
        %vm560 = vcmp.lt.s32.totalorder %v538, 4
        %v561 = vsel %vm557, %v541, %v544
        %v562 = vsel %vm560, %v550, 2102212464
        %v563 = vsel %vm559, %v547, %v562
        %v564 = vsel %vm558, %v561, %v563
        %v565 = vsel %vm557, %v544, %v547
        %v566 = vsel %vm560, %v553, 920167782
        %v567 = vsel %vm559, %v550, %v566
        %v568 = vsel %vm558, %v565, %v567
        %v569 = vsel %vm557, %v547, %v550
        %v570 = vsel %vm560, %v556, 1326507024
        %v571 = vsel %vm559, %v553, %v570
        %v572 = vsel %vm558, %v569, %v571
        %v573 = vshll.u32 %v533, 8
        %v574 = vmul.u32.u64.compose %v573, %v572
        %v575 = vextract.low.u32 %v574
        %v576 = vextract.high.u32 %v574
        %v577 = vmul.u32.u64.compose %v573, %v568
        %v578 = vextract.low.u32 %v577
        %v579 = vextract.high.u32 %v577
        %v580 = vmul.u32 %v573, %v564
        %v581 = vadd.s32 %v576, %v578
        %vm582 = vc.u32 %v576, %v578
        %v583 = vadd.s32 %v579, 1
        %v584 = vsel %vm582, %v583, %v579
        %v585 = vadd.s32 %v580, %v584
        %v586 = vadd.s32 %v585, 536870912
        %v587 = vshrl.u32 %v586, 30
        %v588 = vshll.u32 %v587, 30
        %v589 = vsub.s32 %v585, %v588
        %vm590 = vcmp.lt.s32.totalorder %v589, 0
        %v591 = vsub.s32 0, %v589
        %v592 = vsel %vm590, %v591, %v589
        %v593 = vclz %v592
        %v594 = vsub.s32 %v593, 2
        %vm595 = vcmp.gt.s32.totalorder 0, %v594
        %v596 = vsel %vm595, 0, %v594
        %v597 = vsub.s32 32, %v596
        %v598 = vshll.u32 %v589, %v596
        %v599 = vshrl.u32 %v581, %v597
        %v600 = vor.u32 %v598, %v599
        %v601 = vsub.s32 4294967266, %v596
        %v602 = vadd.s32 %v601, 127
        %v603 = vshll.u32 %v602, 23
        %v604 = vor.u32 4788187, %v603
        %v605 = vand.u32 2147483647, %v604
        %v607 = vcvt.s32.f32 %v600
        %v608 = vmul.f32 %v607, %v605
        %v609 = vxor.u32 %v608, 2147483648
        %v610 = vsel %vm527, %v609, %v608
        %v611 = vsub.s32 4, %v587
        %v612 = vsel %vm527, %v611, %v587
        %v613 = vsel %vm526, %v414, %v610
        %v614 = vsel %vm526, 0, %v612
        %v615 = vcosq.f32.pop %v613
        %v616 = vsinq.f32.pop %v613
        %vm617 = vweird.f32 %v414
        %v618 = vadd.s32 %v614, 3
        %v619 = vand.u32 %v618, 3
        %vm620 = vcmp.lt.s32.totalorder %v619, 2
        %vm621 = vcmp.eq.s32.totalorder %v619, 0
        %v622 = vxor.u32 %v616, 2147483648
        %v623 = vsel %vm621, %v615, %v622
        %vm624 = vcmp.eq.s32.totalorder %v619, 2
        %v625 = vxor.u32 %v615, 2147483648
        %v626 = vsel %vm624, %v625, %v616
        %v627 = vsel %vm620, %v623, %v626
        %v628 = vsel %vm617, nan, %v627
        %v629 = vand.u32 2147483647, %v415
        %vm630 = vcmp.le.f32.partialorder %v629, 0.7853982
        %vm631 = vcmp.lt.s32.totalorder %v415, 0
        %v632 = vand.u32 %v415, 2139095040
        %v633 = vshrl.u32 %v632, 23
        %v634 = vsub.s32 %v633, 127
        %v635 = vand.u32 2147483647, %v415
        %v636 = vand.u32 %v635, 8388607
        %v637 = vor.u32 %v636, 8388608
        %v638 = vsub.s32 0, %v637
        %v639 = vadd.s32 %v634, 1
        %vm640 = vcmp.gt.s32.totalorder %v639, 0
        %v641 = vsel %vm640, %v639, 0
        %v642 = vshrl.u32 %v641, 5
        %v643 = vand.u32 %v641, 31
        %v644 = vsub.s32 32, %v643
        %v645 = vshrl.u32 683565275, %v644
        %v646 = vshll.u32 683565275, %v643
        %v647 = vshrl.u32 2475754826, %v644
        %v648 = vor.u32 %v646, %v647
        %v649 = vshll.u32 2475754826, %v643
        %v650 = vshrl.u32 2131351028, %v644
        %v651 = vor.u32 %v649, %v650
        %v652 = vshll.u32 2131351028, %v643
        %v653 = vshrl.u32 2102212464, %v644
        %v654 = vor.u32 %v652, %v653
        %v655 = vshll.u32 2102212464, %v643
        %v656 = vshrl.u32 920167782, %v644
        %v657 = vor.u32 %v655, %v656
        %v658 = vshll.u32 920167782, %v643
        %v659 = vshrl.u32 1326507024, %v644
        %v660 = vor.u32 %v658, %v659
        %vm661 = vcmp.lt.s32.totalorder %v642, 1
        %vm662 = vcmp.lt.s32.totalorder %v642, 2
        %vm663 = vcmp.lt.s32.totalorder %v642, 3
        %vm664 = vcmp.lt.s32.totalorder %v642, 4
        %v665 = vsel %vm661, %v645, %v648
        %v666 = vsel %vm664, %v654, 2102212464
        %v667 = vsel %vm663, %v651, %v666
        %v668 = vsel %vm662, %v665, %v667
        %v669 = vsel %vm661, %v648, %v651
        %v670 = vsel %vm664, %v657, 920167782
        %v671 = vsel %vm663, %v654, %v670
        %v672 = vsel %vm662, %v669, %v671
        %v673 = vsel %vm661, %v651, %v654
        %v674 = vsel %vm664, %v660, 1326507024
        %v675 = vsel %vm663, %v657, %v674
        %v676 = vsel %vm662, %v673, %v675
        %v677 = vshll.u32 %v637, 8
        %v678 = vmul.u32.u64.compose %v677, %v676
        %v679 = vextract.low.u32 %v678
        %v680 = vextract.high.u32 %v678
        %v681 = vmul.u32.u64.compose %v677, %v672
        %v682 = vextract.low.u32 %v681
        %v683 = vextract.high.u32 %v681
        %v684 = vmul.u32 %v677, %v668
        %v685 = vadd.s32 %v680, %v682
        %vm686 = vc.u32 %v680, %v682
        %v687 = vadd.s32 %v683, 1
        %v688 = vsel %vm686, %v687, %v683
        %v689 = vadd.s32 %v684, %v688
        %v690 = vadd.s32 %v689, 536870912
        %v691 = vshrl.u32 %v690, 30
        %v692 = vshll.u32 %v691, 30
        %v693 = vsub.s32 %v689, %v692
        %vm694 = vcmp.lt.s32.totalorder %v693, 0
        %v695 = vsub.s32 0, %v693
        %v696 = vsel %vm694, %v695, %v693
        %v697 = vclz %v696
        %v698 = vsub.s32 %v697, 2
        %vm699 = vcmp.gt.s32.totalorder 0, %v698
        %v700 = vsel %vm699, 0, %v698
        %v701 = vsub.s32 32, %v700
        %v702 = vshll.u32 %v693, %v700
        %v703 = vshrl.u32 %v685, %v701
        %v704 = vor.u32 %v702, %v703
        %v705 = vsub.s32 4294967266, %v700
        %v706 = vadd.s32 %v705, 127
        %v707 = vshll.u32 %v706, 23
        %v708 = vor.u32 4788187, %v707
        %v709 = vand.u32 2147483647, %v708
        %v711 = vcvt.s32.f32 %v704
        %v712 = vmul.f32 %v711, %v709
        %v713 = vxor.u32 %v712, 2147483648
        %v714 = vsel %vm631, %v713, %v712
        %v715 = vsub.s32 4, %v691
        %v716 = vsel %vm631, %v715, %v691
        %v717 = vsel %vm630, %v415, %v714
        %v718 = vsel %vm630, 0, %v716
        %v719 = vcosq.f32.pop %v717
        %v720 = vsinq.f32.pop %v717
        %vm721 = vweird.f32 %v415
        %v722 = vadd.s32 %v718, 3
        %v723 = vand.u32 %v722, 3
        %vm724 = vcmp.lt.s32.totalorder %v723, 2
        %vm725 = vcmp.eq.s32.totalorder %v723, 0
        %v726 = vxor.u32 %v720, 2147483648
        %v727 = vsel %vm725, %v719, %v726
        %vm728 = vcmp.eq.s32.totalorder %v723, 2
        %v729 = vxor.u32 %v719, 2147483648
        %v730 = vsel %vm728, %v729, %v720
        %v731 = vsel %vm724, %v727, %v730
        %v732 = vsel %vm721, nan, %v731
        %v733 = vand.u32 2147483647, %v416
        %vm734 = vcmp.le.f32.partialorder %v733, 0.7853982
        %vm735 = vcmp.lt.s32.totalorder %v416, 0
        %v736 = vand.u32 %v416, 2139095040
        %v737 = vshrl.u32 %v736, 23
        %v738 = vsub.s32 %v737, 127
        %v739 = vand.u32 2147483647, %v416
        %v740 = vand.u32 %v739, 8388607
        %v741 = vor.u32 %v740, 8388608
        %v742 = vsub.s32 0, %v741
        %v743 = vadd.s32 %v738, 1
        %vm744 = vcmp.gt.s32.totalorder %v743, 0
        %v745 = vsel %vm744, %v743, 0
        %v746 = vshrl.u32 %v745, 5
        %v747 = vand.u32 %v745, 31
        %v748 = vsub.s32 32, %v747
        %v749 = vshrl.u32 683565275, %v748
        %v750 = vshll.u32 683565275, %v747
        %v751 = vshrl.u32 2475754826, %v748
        %v752 = vor.u32 %v750, %v751
        %v753 = vshll.u32 2475754826, %v747
        %v754 = vshrl.u32 2131351028, %v748
        %v755 = vor.u32 %v753, %v754
        %v756 = vshll.u32 2131351028, %v747
        %v757 = vshrl.u32 2102212464, %v748
        %v758 = vor.u32 %v756, %v757
        %v759 = vshll.u32 2102212464, %v747
        %v760 = vshrl.u32 920167782, %v748
        %v761 = vor.u32 %v759, %v760
        %v762 = vshll.u32 920167782, %v747
        %v763 = vshrl.u32 1326507024, %v748
        %v764 = vor.u32 %v762, %v763
        %vm765 = vcmp.lt.s32.totalorder %v746, 1
        %vm766 = vcmp.lt.s32.totalorder %v746, 2
        %vm767 = vcmp.lt.s32.totalorder %v746, 3
        %vm768 = vcmp.lt.s32.totalorder %v746, 4
        %v769 = vsel %vm765, %v749, %v752
        %v770 = vsel %vm768, %v758, 2102212464
        %v771 = vsel %vm767, %v755, %v770
        %v772 = vsel %vm766, %v769, %v771
        %v773 = vsel %vm765, %v752, %v755
        %v774 = vsel %vm768, %v761, 920167782
        %v775 = vsel %vm767, %v758, %v774
        %v776 = vsel %vm766, %v773, %v775
        %v777 = vsel %vm765, %v755, %v758
        %v778 = vsel %vm768, %v764, 1326507024
        %v779 = vsel %vm767, %v761, %v778
        %v780 = vsel %vm766, %v777, %v779
        %v781 = vshll.u32 %v741, 8
        %v782 = vmul.u32.u64.compose %v781, %v780
        %v783 = vextract.low.u32 %v782
        %v784 = vextract.high.u32 %v782
        %v785 = vmul.u32.u64.compose %v781, %v776
        %v786 = vextract.low.u32 %v785
        %v787 = vextract.high.u32 %v785
        %v788 = vmul.u32 %v781, %v772
        %v789 = vadd.s32 %v784, %v786
        %vm790 = vc.u32 %v784, %v786
        %v791 = vadd.s32 %v787, 1
        %v792 = vsel %vm790, %v791, %v787
        %v793 = vadd.s32 %v788, %v792
        %v794 = vadd.s32 %v793, 536870912
        %v795 = vshrl.u32 %v794, 30
        %v796 = vshll.u32 %v795, 30
        %v797 = vsub.s32 %v793, %v796
        %vm798 = vcmp.lt.s32.totalorder %v797, 0
        %v799 = vsub.s32 0, %v797
        %v800 = vsel %vm798, %v799, %v797
        %v801 = vclz %v800
        %v802 = vsub.s32 %v801, 2
        %vm803 = vcmp.gt.s32.totalorder 0, %v802
        %v804 = vsel %vm803, 0, %v802
        %v805 = vsub.s32 32, %v804
        %v806 = vshll.u32 %v797, %v804
        %v807 = vshrl.u32 %v789, %v805
        %v808 = vor.u32 %v806, %v807
        %v809 = vsub.s32 4294967266, %v804
        %v810 = vadd.s32 %v809, 127
        %v811 = vshll.u32 %v810, 23
        %v812 = vor.u32 4788187, %v811
        %v813 = vand.u32 2147483647, %v812
        %v815 = vcvt.s32.f32 %v808
        %v816 = vmul.f32 %v815, %v813
        %v817 = vxor.u32 %v816, 2147483648
        %v818 = vsel %vm735, %v817, %v816
        %v819 = vsub.s32 4, %v795
        %v820 = vsel %vm735, %v819, %v795
        %v821 = vsel %vm734, %v416, %v818
        %v822 = vsel %vm734, 0, %v820
        %v823 = vcosq.f32.pop %v821
        %v824 = vsinq.f32.pop %v821
        %vm825 = vweird.f32 %v416
        %v826 = vadd.s32 %v822, 3
        %v827 = vand.u32 %v826, 3
        %vm828 = vcmp.lt.s32.totalorder %v827, 2
        %vm829 = vcmp.eq.s32.totalorder %v827, 0
        %v830 = vxor.u32 %v824, 2147483648
        %v831 = vsel %vm829, %v823, %v830
        %vm832 = vcmp.eq.s32.totalorder %v827, 2
        %v833 = vxor.u32 %v823, 2147483648
        %v834 = vsel %vm832, %v833, %v824
        %v835 = vsel %vm828, %v831, %v834
        %v836 = vsel %vm825, nan, %v835
        %v837 = vand.u32 2147483647, %v417
        %vm838 = vcmp.le.f32.partialorder %v837, 0.7853982
        %vm839 = vcmp.lt.s32.totalorder %v417, 0
        %v840 = vand.u32 %v417, 2139095040
        %v841 = vshrl.u32 %v840, 23
        %v842 = vsub.s32 %v841, 127
        %v843 = vand.u32 2147483647, %v417
        %v844 = vand.u32 %v843, 8388607
        %v845 = vor.u32 %v844, 8388608
        %v846 = vsub.s32 0, %v845
        %v847 = vadd.s32 %v842, 1
        %vm848 = vcmp.gt.s32.totalorder %v847, 0
        %v849 = vsel %vm848, %v847, 0
        %v850 = vshrl.u32 %v849, 5
        %v851 = vand.u32 %v849, 31
        %v852 = vsub.s32 32, %v851
        %v853 = vshrl.u32 683565275, %v852
        %v854 = vshll.u32 683565275, %v851
        %v855 = vshrl.u32 2475754826, %v852
        %v856 = vor.u32 %v854, %v855
        %v857 = vshll.u32 2475754826, %v851
        %v858 = vshrl.u32 2131351028, %v852
        %v859 = vor.u32 %v857, %v858
        %v860 = vshll.u32 2131351028, %v851
        %v861 = vshrl.u32 2102212464, %v852
        %v862 = vor.u32 %v860, %v861
        %v863 = vshll.u32 2102212464, %v851
        %v864 = vshrl.u32 920167782, %v852
        %v865 = vor.u32 %v863, %v864
        %v866 = vshll.u32 920167782, %v851
        %v867 = vshrl.u32 1326507024, %v852
        %v868 = vor.u32 %v866, %v867
        %vm869 = vcmp.lt.s32.totalorder %v850, 1
        %vm870 = vcmp.lt.s32.totalorder %v850, 2
        %vm871 = vcmp.lt.s32.totalorder %v850, 3
        %vm872 = vcmp.lt.s32.totalorder %v850, 4
        %v873 = vsel %vm869, %v853, %v856
        %v874 = vsel %vm872, %v862, 2102212464
        %v875 = vsel %vm871, %v859, %v874
        %v876 = vsel %vm870, %v873, %v875
        %v877 = vsel %vm869, %v856, %v859
        %v878 = vsel %vm872, %v865, 920167782
        %v879 = vsel %vm871, %v862, %v878
        %v880 = vsel %vm870, %v877, %v879
        %v881 = vsel %vm869, %v859, %v862
        %v882 = vsel %vm872, %v868, 1326507024
        %v883 = vsel %vm871, %v865, %v882
        %v884 = vsel %vm870, %v881, %v883
        %v885 = vshll.u32 %v845, 8
        %v886 = vmul.u32.u64.compose %v885, %v884
        %v887 = vextract.low.u32 %v886
        %v888 = vextract.high.u32 %v886
        %v889 = vmul.u32.u64.compose %v885, %v880
        %v890 = vextract.low.u32 %v889
        %v891 = vextract.high.u32 %v889
        %v892 = vmul.u32 %v885, %v876
        %v893 = vadd.s32 %v888, %v890
        %vm894 = vc.u32 %v888, %v890
        %v895 = vadd.s32 %v891, 1
        %v896 = vsel %vm894, %v895, %v891
        %v897 = vadd.s32 %v892, %v896
        %v898 = vadd.s32 %v897, 536870912
        %v899 = vshrl.u32 %v898, 30
        %v900 = vshll.u32 %v899, 30
        %v901 = vsub.s32 %v897, %v900
        %vm902 = vcmp.lt.s32.totalorder %v901, 0
        %v903 = vsub.s32 0, %v901
        %v904 = vsel %vm902, %v903, %v901
        %v905 = vclz %v904
        %v906 = vsub.s32 %v905, 2
        %vm907 = vcmp.gt.s32.totalorder 0, %v906
        %v908 = vsel %vm907, 0, %v906
        %v909 = vsub.s32 32, %v908
        %v910 = vshll.u32 %v901, %v908
        %v911 = vshrl.u32 %v893, %v909
        %v912 = vor.u32 %v910, %v911
        %v913 = vsub.s32 4294967266, %v908
        %v914 = vadd.s32 %v913, 127
        %v915 = vshll.u32 %v914, 23
        %v916 = vor.u32 4788187, %v915
        %v917 = vand.u32 2147483647, %v916
        %v919 = vcvt.s32.f32 %v912
        %v920 = vmul.f32 %v919, %v917
        %v921 = vxor.u32 %v920, 2147483648
        %v922 = vsel %vm839, %v921, %v920
        %v923 = vsub.s32 4, %v899
        %v924 = vsel %vm839, %v923, %v899
        %v925 = vsel %vm838, %v417, %v922
        %v926 = vsel %vm838, 0, %v924
        %v927 = vcosq.f32.pop %v925
        %v928 = vsinq.f32.pop %v925
        %vm929 = vweird.f32 %v417
        %v930 = vadd.s32 %v926, 3
        %v931 = vand.u32 %v930, 3
        %vm932 = vcmp.lt.s32.totalorder %v931, 2
        %vm933 = vcmp.eq.s32.totalorder %v931, 0
        %v934 = vxor.u32 %v928, 2147483648
        %v935 = vsel %vm933, %v927, %v934
        %vm936 = vcmp.eq.s32.totalorder %v931, 2
        %v937 = vxor.u32 %v927, 2147483648
        %v938 = vsel %vm936, %v937, %v928
        %v939 = vsel %vm932, %v935, %v938
        %v940 = vsel %vm929, nan, %v939
        %v941 = vand.u32 2147483647, %v418
        %vm942 = vcmp.le.f32.partialorder %v941, 0.7853982
        %vm943 = vcmp.lt.s32.totalorder %v418, 0
        %v944 = vand.u32 %v418, 2139095040
        %v945 = vshrl.u32 %v944, 23
        %v946 = vsub.s32 %v945, 127
        %v947 = vand.u32 2147483647, %v418
        %v948 = vand.u32 %v947, 8388607
        %v949 = vor.u32 %v948, 8388608
        %v950 = vsub.s32 0, %v949
        %v951 = vadd.s32 %v946, 1
        %vm952 = vcmp.gt.s32.totalorder %v951, 0
        %v953 = vsel %vm952, %v951, 0
        %v954 = vshrl.u32 %v953, 5
        %v955 = vand.u32 %v953, 31
        %v956 = vsub.s32 32, %v955
        %v957 = vshrl.u32 683565275, %v956
        %v958 = vshll.u32 683565275, %v955
        %v959 = vshrl.u32 2475754826, %v956
        %v960 = vor.u32 %v958, %v959
        %v961 = vshll.u32 2475754826, %v955
        %v962 = vshrl.u32 2131351028, %v956
        %v963 = vor.u32 %v961, %v962
        %v964 = vshll.u32 2131351028, %v955
        %v965 = vshrl.u32 2102212464, %v956
        %v966 = vor.u32 %v964, %v965
        %v967 = vshll.u32 2102212464, %v955
        %v968 = vshrl.u32 920167782, %v956
        %v969 = vor.u32 %v967, %v968
        %v970 = vshll.u32 920167782, %v955
        %v971 = vshrl.u32 1326507024, %v956
        %v972 = vor.u32 %v970, %v971
        %vm973 = vcmp.lt.s32.totalorder %v954, 1
        %vm974 = vcmp.lt.s32.totalorder %v954, 2
        %vm975 = vcmp.lt.s32.totalorder %v954, 3
        %vm976 = vcmp.lt.s32.totalorder %v954, 4
        %v977 = vsel %vm973, %v957, %v960
        %v978 = vsel %vm976, %v966, 2102212464
        %v979 = vsel %vm975, %v963, %v978
        %v980 = vsel %vm974, %v977, %v979
        %v981 = vsel %vm973, %v960, %v963
        %v982 = vsel %vm976, %v969, 920167782
        %v983 = vsel %vm975, %v966, %v982
        %v984 = vsel %vm974, %v981, %v983
        %v985 = vsel %vm973, %v963, %v966
        %v986 = vsel %vm976, %v972, 1326507024
        %v987 = vsel %vm975, %v969, %v986
        %v988 = vsel %vm974, %v985, %v987
        %v989 = vshll.u32 %v949, 8
        %v990 = vmul.u32.u64.compose %v989, %v988
        %v991 = vextract.low.u32 %v990
        %v992 = vextract.high.u32 %v990
        %v993 = vmul.u32.u64.compose %v989, %v984
        %v994 = vextract.low.u32 %v993
        %v995 = vextract.high.u32 %v993
        %v996 = vmul.u32 %v989, %v980
        %v997 = vadd.s32 %v992, %v994
        %vm998 = vc.u32 %v992, %v994
        %v999 = vadd.s32 %v995, 1
        %v1000 = vsel %vm998, %v999, %v995
        %v1001 = vadd.s32 %v996, %v1000
        %v1002 = vadd.s32 %v1001, 536870912
        %v1003 = vshrl.u32 %v1002, 30
        %v1004 = vshll.u32 %v1003, 30
        %v1005 = vsub.s32 %v1001, %v1004
        %vm1006 = vcmp.lt.s32.totalorder %v1005, 0
        %v1007 = vsub.s32 0, %v1005
        %v1008 = vsel %vm1006, %v1007, %v1005
        %v1009 = vclz %v1008
        %v1010 = vsub.s32 %v1009, 2
        %vm1011 = vcmp.gt.s32.totalorder 0, %v1010
        %v1012 = vsel %vm1011, 0, %v1010
        %v1013 = vsub.s32 32, %v1012
        %v1014 = vshll.u32 %v1005, %v1012
        %v1015 = vshrl.u32 %v997, %v1013
        %v1016 = vor.u32 %v1014, %v1015
        %v1017 = vsub.s32 4294967266, %v1012
        %v1018 = vadd.s32 %v1017, 127
        %v1019 = vshll.u32 %v1018, 23
        %v1020 = vor.u32 4788187, %v1019
        %v1021 = vand.u32 2147483647, %v1020
        %v1023 = vcvt.s32.f32 %v1016
        %v1024 = vmul.f32 %v1023, %v1021
        %v1025 = vxor.u32 %v1024, 2147483648
        %v1026 = vsel %vm943, %v1025, %v1024
        %v1027 = vsub.s32 4, %v1003
        %v1028 = vsel %vm943, %v1027, %v1003
        %v1029 = vsel %vm942, %v418, %v1026
        %v1030 = vsel %vm942, 0, %v1028
        %v1031 = vcosq.f32.pop %v1029
        %v1032 = vsinq.f32.pop %v1029
        %vm1033 = vweird.f32 %v418
        %v1034 = vadd.s32 %v1030, 3
        %v1035 = vand.u32 %v1034, 3
        %vm1036 = vcmp.lt.s32.totalorder %v1035, 2
        %vm1037 = vcmp.eq.s32.totalorder %v1035, 0
        %v1038 = vxor.u32 %v1032, 2147483648
        %v1039 = vsel %vm1037, %v1031, %v1038
        %vm1040 = vcmp.eq.s32.totalorder %v1035, 2
        %v1041 = vxor.u32 %v1031, 2147483648
        %v1042 = vsel %vm1040, %v1041, %v1032
        %v1043 = vsel %vm1036, %v1039, %v1042
        %v1044 = vsel %vm1033, nan, %v1043
        %v1045 = vand.u32 2147483647, %v419
        %vm1046 = vcmp.le.f32.partialorder %v1045, 0.7853982
        %vm1047 = vcmp.lt.s32.totalorder %v419, 0
        %v1048 = vand.u32 %v419, 2139095040
        %v1049 = vshrl.u32 %v1048, 23
        %v1050 = vsub.s32 %v1049, 127
        %v1051 = vand.u32 2147483647, %v419
        %v1052 = vand.u32 %v1051, 8388607
        %v1053 = vor.u32 %v1052, 8388608
        %v1054 = vsub.s32 0, %v1053
        %v1055 = vadd.s32 %v1050, 1
        %vm1056 = vcmp.gt.s32.totalorder %v1055, 0
        %v1057 = vsel %vm1056, %v1055, 0
        %v1058 = vshrl.u32 %v1057, 5
        %v1059 = vand.u32 %v1057, 31
        %v1060 = vsub.s32 32, %v1059
        %v1061 = vshrl.u32 683565275, %v1060
        %v1062 = vshll.u32 683565275, %v1059
        %v1063 = vshrl.u32 2475754826, %v1060
        %v1064 = vor.u32 %v1062, %v1063
        %v1065 = vshll.u32 2475754826, %v1059
        %v1066 = vshrl.u32 2131351028, %v1060
        %v1067 = vor.u32 %v1065, %v1066
        %v1068 = vshll.u32 2131351028, %v1059
        %v1069 = vshrl.u32 2102212464, %v1060
        %v1070 = vor.u32 %v1068, %v1069
        %v1071 = vshll.u32 2102212464, %v1059
        %v1072 = vshrl.u32 920167782, %v1060
        %v1073 = vor.u32 %v1071, %v1072
        %v1074 = vshll.u32 920167782, %v1059
        %v1075 = vshrl.u32 1326507024, %v1060
        %v1076 = vor.u32 %v1074, %v1075
        %vm1077 = vcmp.lt.s32.totalorder %v1058, 1
        %vm1078 = vcmp.lt.s32.totalorder %v1058, 2
        %vm1079 = vcmp.lt.s32.totalorder %v1058, 3
        %vm1080 = vcmp.lt.s32.totalorder %v1058, 4
        %v1081 = vsel %vm1077, %v1061, %v1064
        %v1082 = vsel %vm1080, %v1070, 2102212464
        %v1083 = vsel %vm1079, %v1067, %v1082
        %v1084 = vsel %vm1078, %v1081, %v1083
        %v1085 = vsel %vm1077, %v1064, %v1067
        %v1086 = vsel %vm1080, %v1073, 920167782
        %v1087 = vsel %vm1079, %v1070, %v1086
        %v1088 = vsel %vm1078, %v1085, %v1087
        %v1089 = vsel %vm1077, %v1067, %v1070
        %v1090 = vsel %vm1080, %v1076, 1326507024
        %v1091 = vsel %vm1079, %v1073, %v1090
        %v1092 = vsel %vm1078, %v1089, %v1091
        %v1093 = vshll.u32 %v1053, 8
        %v1094 = vmul.u32.u64.compose %v1093, %v1092
        %v1095 = vextract.low.u32 %v1094
        %v1096 = vextract.high.u32 %v1094
        %v1097 = vmul.u32.u64.compose %v1093, %v1088
        %v1098 = vextract.low.u32 %v1097
        %v1099 = vextract.high.u32 %v1097
        %v1100 = vmul.u32 %v1093, %v1084
        %v1101 = vadd.s32 %v1096, %v1098
        %vm1102 = vc.u32 %v1096, %v1098
        %v1103 = vadd.s32 %v1099, 1
        %v1104 = vsel %vm1102, %v1103, %v1099
        %v1105 = vadd.s32 %v1100, %v1104
        %v1106 = vadd.s32 %v1105, 536870912
        %v1107 = vshrl.u32 %v1106, 30
        %v1108 = vshll.u32 %v1107, 30
        %v1109 = vsub.s32 %v1105, %v1108
        %vm1110 = vcmp.lt.s32.totalorder %v1109, 0
        %v1111 = vsub.s32 0, %v1109
        %v1112 = vsel %vm1110, %v1111, %v1109
        %v1113 = vclz %v1112
        %v1114 = vsub.s32 %v1113, 2
        %vm1115 = vcmp.gt.s32.totalorder 0, %v1114
        %v1116 = vsel %vm1115, 0, %v1114
        %v1117 = vsub.s32 32, %v1116
        %v1118 = vshll.u32 %v1109, %v1116
        %v1119 = vshrl.u32 %v1101, %v1117
        %v1120 = vor.u32 %v1118, %v1119
        %v1121 = vsub.s32 4294967266, %v1116
        %v1122 = vadd.s32 %v1121, 127
        %v1123 = vshll.u32 %v1122, 23
        %v1124 = vor.u32 4788187, %v1123
        %v1125 = vand.u32 2147483647, %v1124
        %v1127 = vcvt.s32.f32 %v1120
        %v1128 = vmul.f32 %v1127, %v1125
        %v1129 = vxor.u32 %v1128, 2147483648
        %v1130 = vsel %vm1047, %v1129, %v1128
        %v1131 = vsub.s32 4, %v1107
        %v1132 = vsel %vm1047, %v1131, %v1107
        %v1133 = vsel %vm1046, %v419, %v1130
        %v1134 = vsel %vm1046, 0, %v1132
        %v1135 = vcosq.f32.pop %v1133
        %v1136 = vsinq.f32.pop %v1133
        %vm1137 = vweird.f32 %v419
        %v1138 = vadd.s32 %v1134, 3
        %v1139 = vand.u32 %v1138, 3
        %vm1140 = vcmp.lt.s32.totalorder %v1139, 2
        %vm1141 = vcmp.eq.s32.totalorder %v1139, 0
        %v1142 = vxor.u32 %v1136, 2147483648
        %v1143 = vsel %vm1141, %v1135, %v1142
        %vm1144 = vcmp.eq.s32.totalorder %v1139, 2
        %v1145 = vxor.u32 %v1135, 2147483648
        %v1146 = vsel %vm1144, %v1145, %v1136
        %v1147 = vsel %vm1140, %v1143, %v1146
        %v1148 = vsel %vm1137, nan, %v1147
        %v1149 = vand.u32 2147483647, %v420
        %vm1150 = vcmp.le.f32.partialorder %v1149, 0.7853982
        %vm1151 = vcmp.lt.s32.totalorder %v420, 0
        %v1152 = vand.u32 %v420, 2139095040
        %v1153 = vshrl.u32 %v1152, 23
        %v1154 = vsub.s32 %v1153, 127
        %v1155 = vand.u32 2147483647, %v420
        %v1156 = vand.u32 %v1155, 8388607
        %v1157 = vor.u32 %v1156, 8388608
        %v1158 = vsub.s32 0, %v1157
        %v1159 = vadd.s32 %v1154, 1
        %vm1160 = vcmp.gt.s32.totalorder %v1159, 0
        %v1161 = vsel %vm1160, %v1159, 0
        %v1162 = vshrl.u32 %v1161, 5
        %v1163 = vand.u32 %v1161, 31
        %v1164 = vsub.s32 32, %v1163
        %v1165 = vshrl.u32 683565275, %v1164
        %v1166 = vshll.u32 683565275, %v1163
        %v1167 = vshrl.u32 2475754826, %v1164
        %v1168 = vor.u32 %v1166, %v1167
        %v1169 = vshll.u32 2475754826, %v1163
        %v1170 = vshrl.u32 2131351028, %v1164
        %v1171 = vor.u32 %v1169, %v1170
        %v1172 = vshll.u32 2131351028, %v1163
        %v1173 = vshrl.u32 2102212464, %v1164
        %v1174 = vor.u32 %v1172, %v1173
        %v1175 = vshll.u32 2102212464, %v1163
        %v1176 = vshrl.u32 920167782, %v1164
        %v1177 = vor.u32 %v1175, %v1176
        %v1178 = vshll.u32 920167782, %v1163
        %v1179 = vshrl.u32 1326507024, %v1164
        %v1180 = vor.u32 %v1178, %v1179
        %vm1181 = vcmp.lt.s32.totalorder %v1162, 1
        %vm1182 = vcmp.lt.s32.totalorder %v1162, 2
        %vm1183 = vcmp.lt.s32.totalorder %v1162, 3
        %vm1184 = vcmp.lt.s32.totalorder %v1162, 4
        %v1185 = vsel %vm1181, %v1165, %v1168
        %v1186 = vsel %vm1184, %v1174, 2102212464
        %v1187 = vsel %vm1183, %v1171, %v1186
        %v1188 = vsel %vm1182, %v1185, %v1187
        %v1189 = vsel %vm1181, %v1168, %v1171
        %v1190 = vsel %vm1184, %v1177, 920167782
        %v1191 = vsel %vm1183, %v1174, %v1190
        %v1192 = vsel %vm1182, %v1189, %v1191
        %v1193 = vsel %vm1181, %v1171, %v1174
        %v1194 = vsel %vm1184, %v1180, 1326507024
        %v1195 = vsel %vm1183, %v1177, %v1194
        %v1196 = vsel %vm1182, %v1193, %v1195
        %v1197 = vshll.u32 %v1157, 8
        %v1198 = vmul.u32.u64.compose %v1197, %v1196
        %v1199 = vextract.low.u32 %v1198
        %v1200 = vextract.high.u32 %v1198
        %v1201 = vmul.u32.u64.compose %v1197, %v1192
        %v1202 = vextract.low.u32 %v1201
        %v1203 = vextract.high.u32 %v1201
        %v1204 = vmul.u32 %v1197, %v1188
        %v1205 = vadd.s32 %v1200, %v1202
        %vm1206 = vc.u32 %v1200, %v1202
        %v1207 = vadd.s32 %v1203, 1
        %v1208 = vsel %vm1206, %v1207, %v1203
        %v1209 = vadd.s32 %v1204, %v1208
        %v1210 = vadd.s32 %v1209, 536870912
        %v1211 = vshrl.u32 %v1210, 30
        %v1212 = vshll.u32 %v1211, 30
        %v1213 = vsub.s32 %v1209, %v1212
        %vm1214 = vcmp.lt.s32.totalorder %v1213, 0
        %v1215 = vsub.s32 0, %v1213
        %v1216 = vsel %vm1214, %v1215, %v1213
        %v1217 = vclz %v1216
        %v1218 = vsub.s32 %v1217, 2
        %vm1219 = vcmp.gt.s32.totalorder 0, %v1218
        %v1220 = vsel %vm1219, 0, %v1218
        %v1221 = vsub.s32 32, %v1220
        %v1222 = vshll.u32 %v1213, %v1220
        %v1223 = vshrl.u32 %v1205, %v1221
        %v1224 = vor.u32 %v1222, %v1223
        %v1225 = vsub.s32 4294967266, %v1220
        %v1226 = vadd.s32 %v1225, 127
        %v1227 = vshll.u32 %v1226, 23
        %v1228 = vor.u32 4788187, %v1227
        %v1229 = vand.u32 2147483647, %v1228
        %v1231 = vcvt.s32.f32 %v1224
        %v1232 = vmul.f32 %v1231, %v1229
        %v1233 = vxor.u32 %v1232, 2147483648
        %v1234 = vsel %vm1151, %v1233, %v1232
        %v1235 = vsub.s32 4, %v1211
        %v1236 = vsel %vm1151, %v1235, %v1211
        %v1237 = vsel %vm1150, %v420, %v1234
        %v1238 = vsel %vm1150, 0, %v1236
        %v1239 = vcosq.f32.pop %v1237
        %v1240 = vsinq.f32.pop %v1237
        %vm1241 = vweird.f32 %v420
        %v1242 = vadd.s32 %v1238, 3
        %v1243 = vand.u32 %v1242, 3
        %vm1244 = vcmp.lt.s32.totalorder %v1243, 2
        %vm1245 = vcmp.eq.s32.totalorder %v1243, 0
        %v1246 = vxor.u32 %v1240, 2147483648
        %v1247 = vsel %vm1245, %v1239, %v1246
        %vm1248 = vcmp.eq.s32.totalorder %v1243, 2
        %v1249 = vxor.u32 %v1239, 2147483648
        %v1250 = vsel %vm1248, %v1249, %v1240
        %v1251 = vsel %vm1244, %v1247, %v1250
        %v1252 = vsel %vm1241, nan, %v1251
        %v1253 = vpack.c.bf16 %v732, %v524
        %v1254 = vpack.c.bf16 %v836, %v628
        %v1255 = vpack.c.bf16 %v1148, %v940
        %v1256 = vpack.c.bf16 %v1252, %v1044
        %v1257 = vld [vmem:[%s2] sm:$0xf]
        %v1258 = vld [vmem:[%s2 + $0x4] sm:$0xf]
        %v1259 = vld [vmem:[%s2 + $0x8] sm:$0xf]
        %v1260 = vld [vmem:[%s2 + $0xc] sm:$0xf]
        %v1261 = vld [vmem:[%s3] sm:$0xff]
        %v1262 = vld [vmem:[%s3 + $0x8] sm:$0xff]
        %v1263 = vld [vmem:[%s3 + $0x10] sm:$0xff]
        %v1264 = vld [vmem:[%s3 + $0x18] sm:$0xff]
        %1266 = vset.pattern.permute.xlu0 0
        %1267 = vperm.xlu0 %1266, %v1261
        %v1268 = vpop.permute.xlu0 %1267
        %1271 = vset.pattern.permute.xlu0 0
        %1272 = vperm.xlu0 %1271, %v1262
        %v1273 = vpop.permute.xlu0 %1272
        %1276 = vset.pattern.permute.xlu0 0
        %1277 = vperm.xlu0 %1276, %v1263
        %v1278 = vpop.permute.xlu0 %1277
        %1281 = vset.pattern.permute.xlu0 0
        %1282 = vperm.xlu0 %1281, %v1264
        %v1283 = vpop.permute.xlu0 %1282
        %v1289 = vunpack.c.l.b16 %v1257
        %v1290 = vunpack.c.l.b16 %v1258
        %v1291 = vunpack.c.l.b16 %v1259
        %v1292 = vunpack.c.l.b16 %v1260
        %v1293 = vpack.c.b16 %v1290, %v1289
        %v1294 = vpack.c.b16 %v1292, %v1291
        %vm1295 = vcmask 261120
        %v1297 = vsel %vm1295, %v1293, 0
        %v1300 = vsel %vm1295, %v1294, 0
        %1302 = vmatprep.subr.bf16.mxu0 %v1254
        %1303 = vmatpush1.bf16.msra.mxu0 %v1253
        %1304 = vmatprep.subr.bf16.mxu0 %v1256
        %1305 = vmatpush1.bf16.msra.mxu0 %v1255
        %1306 = vmatprep.subr.bf16.mxu0 0
        %1307 = vmatpush1.bf16.msra.mxu0 0
        %1308 = vmatprep.subr.bf16.mxu0 0
        %1309 = vmatpush1.bf16.msra.mxu0 0
        %1310 = vmatprep.subr.bf16.mxu0 0
        %1311 = vmatpush1.bf16.msra.mxu0 0
        %1312 = vmatprep.subr.bf16.mxu0 0
        %1313 = vmatpush1.bf16.msra.mxu0 0
        %1314 = vmatprep.subr.bf16.mxu0 0
        %1315 = vmatpush1.bf16.msra.mxu0 0
        %1316 = vmatprep.subr.bf16.mxu0 0
        %1317 = vmatpush1.bf16.msra.mxu0 0
        %1318 = vmatprep.subr.bf16.mxu0 0
        %1319 = vmatpush1.bf16.msra.mxu0 0
        %1320 = vmatprep.subr.bf16.mxu0 0
        %1321 = vmatpush1.bf16.msra.mxu0 0
        %1322 = vmatprep.subr.bf16.mxu0 0
        %1323 = vmatpush1.bf16.msra.mxu0 0
        %1324 = vmatprep.subr.bf16.mxu0 0
        %1325 = vmatpush1.bf16.msra.mxu0 0
        %1326 = vmatprep.subr.bf16.mxu0 0
        %1327 = vmatpush1.bf16.msra.mxu0 0
        %1328 = vmatprep.subr.bf16.mxu0 0
        %1329 = vmatpush1.bf16.msra.mxu0 0
        %1330 = vmatprep.subr.bf16.mxu0 0
        %1331 = vmatpush1.bf16.msra.mxu0 0
        %1332 = vmatprep.subr.bf16.mxu0 0
        %1333 = vmatpush1.bf16.msra.mxu0 0
        %1334 = vmatprep.mubr.bf16.mxu0 0
        %1335 = vmatmul.mubr.bf16.gmra.mrb[0].mxu0 %v1297
        %v1336 = vpop.f32.mrb[0].mxu0
        %v1337 = vadd.f32 %v1268, %v1336
        %v1338 = vpop.f32.mrb[0].mxu0
        %v1339 = vadd.f32 %v1268, %v1338
        %v1340 = vpop.f32.mrb[0].mxu0
        %v1341 = vadd.f32 %v1273, %v1340
        %v1342 = vpop.f32.mrb[0].mxu0
        %v1343 = vadd.f32 %v1273, %v1342
        %1344 = vmatprep.mubr.bf16.mxu0 0
        %1345 = vmatmul.mubr.bf16.gmra.mrb[0].mxu0 %v1300
        %v1346 = vpop.f32.mrb[0].mxu0
        %v1347 = vadd.f32 %v1278, %v1346
        %v1348 = vpop.f32.mrb[0].mxu0
        %v1349 = vadd.f32 %v1278, %v1348
        %v1350 = vpop.f32.mrb[0].mxu0
        %v1351 = vadd.f32 %v1283, %v1350
        %v1352 = vpop.f32.mrb[0].mxu0
        %v1353 = vadd.f32 %v1283, %v1352
        %1354 = vdwg.mxu0
        %v1355 = vmax.f32 %v1337, 0.0
        %v1356 = vmax.f32 %v1339, 0.0
        %v1357 = vmax.f32 %v1341, 0.0
        %v1358 = vmax.f32 %v1343, 0.0
        %v1359 = vmax.f32 %v1347, 0.0
        %v1360 = vmax.f32 %v1349, 0.0
        %v1361 = vmax.f32 %v1351, 0.0
        %v1362 = vmax.f32 %v1353, 0.0
        %v1363 = vld [vmem:[%s4] sm:$0xf]
        %v1364 = vld [vmem:[%s4 + $0x4] sm:$0xf]
        %v1365 = vld [vmem:[%s4 + $0x8] sm:$0xf]
        %v1366 = vld [vmem:[%s4 + $0xc] sm:$0xf]
        %v1367 = vpack.c.bf16 %v1357, %v1355
        %v1368 = vpack.c.bf16 %v1358, %v1356
        %v1369 = vpack.c.bf16 %v1361, %v1359
        %v1370 = vpack.c.bf16 %v1362, %v1360
        %v1371 = vld [vmem:[%s5] sm:$0xff]
        %v1372 = vld [vmem:[%s5 + $0x8] sm:$0xff]
        %v1373 = vld [vmem:[%s5 + $0x10] sm:$0xff]
        %v1374 = vld [vmem:[%s5 + $0x18] sm:$0xff]
        %1376 = vset.pattern.permute.xlu0 0
        %1377 = vperm.xlu0 %1376, %v1371
        %v1378 = vpop.permute.xlu0 %1377
        %1381 = vset.pattern.permute.xlu0 0
        %1382 = vperm.xlu0 %1381, %v1372
        %v1383 = vpop.permute.xlu0 %1382
        %1386 = vset.pattern.permute.xlu0 0
        %1387 = vperm.xlu0 %1386, %v1373
        %v1388 = vpop.permute.xlu0 %1387
        %1391 = vset.pattern.permute.xlu0 0
        %1392 = vperm.xlu0 %1391, %v1374
        %v1393 = vpop.permute.xlu0 %1392
        %v1399 = vunpack.c.l.b16 %v1363
        %v1400 = vunpack.c.l.b16 %v1364
        %v1401 = vunpack.c.l.b16 %v1365
        %v1402 = vunpack.c.l.b16 %v1366
        %v1403 = vpack.c.b16 %v1400, %v1399
        %v1404 = vpack.c.b16 %v1402, %v1401
        %v1406 = vsel %vm1295, %v1403, 0
        %v1409 = vsel %vm1295, %v1404, 0
        %1411 = vmatprep.subr.bf16.mxu0 %v1368
        %1412 = vmatpush1.bf16.msra.mxu0 %v1367
        %1413 = vmatprep.subr.bf16.mxu0 %v1370
        %1414 = vmatpush1.bf16.msra.mxu0 %v1369
        %1415 = vmatprep.subr.bf16.mxu0 0
        %1416 = vmatpush1.bf16.msra.mxu0 0
        %1417 = vmatprep.subr.bf16.mxu0 0
        %1418 = vmatpush1.bf16.msra.mxu0 0
        %1419 = vmatprep.subr.bf16.mxu0 0
        %1420 = vmatpush1.bf16.msra.mxu0 0
        %1421 = vmatprep.subr.bf16.mxu0 0
        %1422 = vmatpush1.bf16.msra.mxu0 0
        %1423 = vmatprep.subr.bf16.mxu0 0
        %1424 = vmatpush1.bf16.msra.mxu0 0
        %1425 = vmatprep.subr.bf16.mxu0 0
        %1426 = vmatpush1.bf16.msra.mxu0 0
        %1427 = vmatprep.subr.bf16.mxu0 0
        %1428 = vmatpush1.bf16.msra.mxu0 0
        %1429 = vmatprep.subr.bf16.mxu0 0
        %1430 = vmatpush1.bf16.msra.mxu0 0
        %1431 = vmatprep.subr.bf16.mxu0 0
        %1432 = vmatpush1.bf16.msra.mxu0 0
        %1433 = vmatprep.subr.bf16.mxu0 0
        %1434 = vmatpush1.bf16.msra.mxu0 0
        %1435 = vmatprep.subr.bf16.mxu0 0
        %1436 = vmatpush1.bf16.msra.mxu0 0
        %1437 = vmatprep.subr.bf16.mxu0 0
        %1438 = vmatpush1.bf16.msra.mxu0 0
        %1439 = vmatprep.subr.bf16.mxu0 0
        %1440 = vmatpush1.bf16.msra.mxu0 0
        %1441 = vmatprep.subr.bf16.mxu0 0
        %1442 = vmatpush1.bf16.msra.mxu0 0
        %1443 = vmatprep.mubr.bf16.mxu0 0
        %1444 = vmatmul.mubr.bf16.gmra.mrb[0].mxu0 %v1406
        %v1445 = vpop.f32.mrb[0].mxu0
        %v1446 = vadd.f32 %v1378, %v1445
        %v1447 = vpop.f32.mrb[0].mxu0
        %v1448 = vadd.f32 %v1378, %v1447
        %v1449 = vpop.f32.mrb[0].mxu0
        %v1450 = vadd.f32 %v1383, %v1449
        %v1451 = vpop.f32.mrb[0].mxu0
        %v1452 = vadd.f32 %v1383, %v1451
        %1453 = vmatprep.mubr.bf16.mxu0 0
        %1454 = vmatmul.mubr.bf16.gmra.mrb[0].mxu0 %v1409
        %v1455 = vpop.f32.mrb[0].mxu0
        %v1456 = vadd.f32 %v1388, %v1455
        %v1457 = vpop.f32.mrb[0].mxu0
        %v1458 = vadd.f32 %v1388, %v1457
        %v1459 = vpop.f32.mrb[0].mxu0
        %v1460 = vadd.f32 %v1393, %v1459
        %v1461 = vpop.f32.mrb[0].mxu0
        %v1462 = vadd.f32 %v1393, %v1461
        %1463 = vdwg.mxu0
        %v1464 = vmax.f32 %v1446, 0.0
        %v1465 = vmax.f32 %v1448, 0.0
        %v1466 = vmax.f32 %v1450, 0.0
        %v1467 = vmax.f32 %v1452, 0.0
        %v1468 = vmax.f32 %v1456, 0.0
        %v1469 = vmax.f32 %v1458, 0.0
        %v1470 = vmax.f32 %v1460, 0.0
        %v1471 = vmax.f32 %v1462, 0.0
        %s1472 = scalar_lea.vmem %s4, 16
        %v1473 = vld [vmem:[%s1472] sm:$0xf]
        %v1474 = vld [vmem:[%s1472 + $0x4] sm:$0xf]
        %v1475 = vld [vmem:[%s1472 + $0x8] sm:$0xf]
        %v1476 = vld [vmem:[%s1472 + $0xc] sm:$0xf]
        %v1477 = vpack.c.bf16 %v1466, %v1464
        %v1478 = vpack.c.bf16 %v1467, %v1465
        %v1479 = vpack.c.bf16 %v1470, %v1468
        %v1480 = vpack.c.bf16 %v1471, %v1469
        %s1481 = scalar_lea.vmem %s5, 32
        %v1482 = vld [vmem:[%s1481] sm:$0xff]
        %v1483 = vld [vmem:[%s1481 + $0x8] sm:$0xff]
        %v1484 = vld [vmem:[%s1481 + $0x10] sm:$0xff]
        %v1485 = vld [vmem:[%s1481 + $0x18] sm:$0xff]
        %1487 = vset.pattern.permute.xlu0 0
        %1488 = vperm.xlu0 %1487, %v1482
        %v1489 = vpop.permute.xlu0 %1488
        %1492 = vset.pattern.permute.xlu0 0
        %1493 = vperm.xlu0 %1492, %v1483
        %v1494 = vpop.permute.xlu0 %1493
        %1497 = vset.pattern.permute.xlu0 0
        %1498 = vperm.xlu0 %1497, %v1484
        %v1499 = vpop.permute.xlu0 %1498
        %1502 = vset.pattern.permute.xlu0 0
        %1503 = vperm.xlu0 %1502, %v1485
        %v1504 = vpop.permute.xlu0 %1503
        %v1510 = vunpack.c.l.b16 %v1473
        %v1511 = vunpack.c.l.b16 %v1474
        %v1512 = vunpack.c.l.b16 %v1475
        %v1513 = vunpack.c.l.b16 %v1476
        %v1514 = vpack.c.b16 %v1511, %v1510
        %v1515 = vpack.c.b16 %v1513, %v1512
        %v1517 = vsel %vm1295, %v1514, 0
        %v1520 = vsel %vm1295, %v1515, 0
        %1522 = vmatprep.subr.bf16.mxu0 %v1478
        %1523 = vmatpush1.bf16.msra.mxu0 %v1477
        %1524 = vmatprep.subr.bf16.mxu0 %v1480
        %1525 = vmatpush1.bf16.msra.mxu0 %v1479
        %1526 = vmatprep.subr.bf16.mxu0 0
        %1527 = vmatpush1.bf16.msra.mxu0 0
        %1528 = vmatprep.subr.bf16.mxu0 0
        %1529 = vmatpush1.bf16.msra.mxu0 0
        %1530 = vmatprep.subr.bf16.mxu0 0
        %1531 = vmatpush1.bf16.msra.mxu0 0
        %1532 = vmatprep.subr.bf16.mxu0 0
        %1533 = vmatpush1.bf16.msra.mxu0 0
        %1534 = vmatprep.subr.bf16.mxu0 0
        %1535 = vmatpush1.bf16.msra.mxu0 0
        %1536 = vmatprep.subr.bf16.mxu0 0
        %1537 = vmatpush1.bf16.msra.mxu0 0
        %1538 = vmatprep.subr.bf16.mxu0 0
        %1539 = vmatpush1.bf16.msra.mxu0 0
        %1540 = vmatprep.subr.bf16.mxu0 0
        %1541 = vmatpush1.bf16.msra.mxu0 0
        %1542 = vmatprep.subr.bf16.mxu0 0
        %1543 = vmatpush1.bf16.msra.mxu0 0
        %1544 = vmatprep.subr.bf16.mxu0 0
        %1545 = vmatpush1.bf16.msra.mxu0 0
        %1546 = vmatprep.subr.bf16.mxu0 0
        %1547 = vmatpush1.bf16.msra.mxu0 0
        %1548 = vmatprep.subr.bf16.mxu0 0
        %1549 = vmatpush1.bf16.msra.mxu0 0
        %1550 = vmatprep.subr.bf16.mxu0 0
        %1551 = vmatpush1.bf16.msra.mxu0 0
        %1552 = vmatprep.subr.bf16.mxu0 0
        %1553 = vmatpush1.bf16.msra.mxu0 0
        %1554 = vmatprep.mubr.bf16.mxu0 0
        %1555 = vmatmul.mubr.bf16.gmra.mrb[0].mxu0 %v1517
        %v1556 = vpop.f32.mrb[0].mxu0
        %v1557 = vadd.f32 %v1489, %v1556
        %v1558 = vpop.f32.mrb[0].mxu0
        %v1559 = vadd.f32 %v1489, %v1558
        %v1560 = vpop.f32.mrb[0].mxu0
        %v1561 = vadd.f32 %v1494, %v1560
        %v1562 = vpop.f32.mrb[0].mxu0
        %v1563 = vadd.f32 %v1494, %v1562
        %1564 = vmatprep.mubr.bf16.mxu0 0
        %1565 = vmatmul.mubr.bf16.gmra.mrb[0].mxu0 %v1520
        %v1566 = vpop.f32.mrb[0].mxu0
        %v1567 = vadd.f32 %v1499, %v1566
        %v1568 = vpop.f32.mrb[0].mxu0
        %v1569 = vadd.f32 %v1499, %v1568
        %v1570 = vpop.f32.mrb[0].mxu0
        %v1571 = vadd.f32 %v1504, %v1570
        %v1572 = vpop.f32.mrb[0].mxu0
        %v1573 = vadd.f32 %v1504, %v1572
        %1574 = vdwg.mxu0
        %v1575 = vmax.f32 %v1557, 0.0
        %v1576 = vmax.f32 %v1559, 0.0
        %v1577 = vmax.f32 %v1561, 0.0
        %v1578 = vmax.f32 %v1563, 0.0
        %v1579 = vmax.f32 %v1567, 0.0
        %v1580 = vmax.f32 %v1569, 0.0
        %v1581 = vmax.f32 %v1571, 0.0
        %v1582 = vmax.f32 %v1573, 0.0
        %v1583 = vld [vmem:[%s6] sm:$0x3]
        %v1584 = vpack.c.bf16 %v1577, %v1575
        %v1585 = vpack.c.bf16 %v1578, %v1576
        %v1586 = vpack.c.bf16 %v1581, %v1579
        %v1587 = vpack.c.bf16 %v1582, %v1580
        %v1588 = vld [vmem:[%s7] sm:$0x7]
        %1590 = vset.pattern.permute.xlu0 0
        %1591 = vperm.xlu0 %1590, %v1588
        %v1592 = vpop.permute.xlu0 %1591
        %v1595 = vsel %vm1295, %v1583, 0
        %1597 = vmatprep.subr.bf16.mxu0 %v1585
        %1598 = vmatpush1.bf16.msra.mxu0 %v1584
        %1599 = vmatprep.subr.bf16.mxu0 %v1587
        %1600 = vmatpush1.bf16.msra.mxu0 %v1586
        %1601 = vmatprep.subr.bf16.mxu0 0
        %1602 = vmatpush1.bf16.msra.mxu0 0
        %1603 = vmatprep.subr.bf16.mxu0 0
        %1604 = vmatpush1.bf16.msra.mxu0 0
        %1605 = vmatprep.subr.bf16.mxu0 0
        %1606 = vmatpush1.bf16.msra.mxu0 0
        %1607 = vmatprep.subr.bf16.mxu0 0
        %1608 = vmatpush1.bf16.msra.mxu0 0
        %1609 = vmatprep.subr.bf16.mxu0 0
        %1610 = vmatpush1.bf16.msra.mxu0 0
        %1611 = vmatprep.subr.bf16.mxu0 0
        %1612 = vmatpush1.bf16.msra.mxu0 0
        %1613 = vmatprep.subr.bf16.mxu0 0
        %1614 = vmatpush1.bf16.msra.mxu0 0
        %1615 = vmatprep.subr.bf16.mxu0 0
        %1616 = vmatpush1.bf16.msra.mxu0 0
        %1617 = vmatprep.subr.bf16.mxu0 0
        %1618 = vmatpush1.bf16.msra.mxu0 0
        %1619 = vmatprep.subr.bf16.mxu0 0
        %1620 = vmatpush1.bf16.msra.mxu0 0
        %1621 = vmatprep.subr.bf16.mxu0 0
        %1622 = vmatpush1.bf16.msra.mxu0 0
        %1623 = vmatprep.subr.bf16.mxu0 0
        %1624 = vmatpush1.bf16.msra.mxu0 0
        %1625 = vmatprep.subr.bf16.mxu0 0
        %1626 = vmatpush1.bf16.msra.mxu0 0
        %1627 = vmatprep.subr.bf16.mxu0 0
        %1628 = vmatpush1.bf16.msra.mxu0 0
        %1629 = vmatprep.mubr.bf16.mxu0 0
        %1630 = vmatmul.mubr.bf16.gmra.mrb[0].mxu0 %v1595
        %v1631 = vpop.f32.mrb[0].mxu0
        %v1632 = vadd.f32 %v1592, %v1631
        %v1633 = vpop.f32.mrb[0].mxu0
        %v1634 = vadd.f32 %v1592, %v1633
        %v1635 = vpop.f32.mrb[0].mxu0
        %v1636 = vpop.f32.mrb[0].mxu0
        %1637 = vdwg.mxu0
        %v1638 = vxor.u32 %v1632, 2147483648
        %v1639 = vxor.u32 %v1634, 2147483648
        %v1640 = vmul.f32 %v1638, 1.442695
        %v1641 = vpow.pop %v1640
        %v1642 = vmul.f32 %v1639, 1.442695
        %v1643 = vpow.pop %v1642
        %v1644 = vadd.f32 %v1641, 1.0
        %v1645 = vadd.f32 %v1643, 1.0
        %v1646 = vrcp.pop %v1644
        %v1647 = vmul.f32 1.0, %v1646
        %v1648 = vrcp.pop %v1645
        %v1649 = vmul.f32 1.0, %v1648
        %v1652 = vcombine.low %v1647, %v1649
        %1654 = vst [vmem:[%s299] sm:$0x77] %v1652
        %s1655 = sand.u32 %s203, 1
        %s1656 = scalar_lea.sflag [#allocation3], %s1655
        %s1657 = sand.u32 %s203, 1
        %s1658 = smul.addr %s1657, 8
        %s1659 = scalar_lea.vmem [#allocation2], %s1658
        // Predicated region
        $region53: #{tpu_custom_call.1} parent=51 // pred_check
          %p1660 = pneg %p213
        $region54: #{tpu_custom_call.1} parent=51 // pred_check_branch
          %1662 = sbr.rel (%p1660) target = $region56
        $region55: #{tpu_custom_call.1} parent=51 // pred_region
          %s1663 = smul.u32 2, %s22
          %s1665 = ssub.s32 128, 128
          %1666 = vsyncadd %s1656, %s1665
          %s1667 = smul.addr %s1663, 64
          %s1668 = scalar_lea.hbm %s8, %s1667
          %s1670 = sshll.u32 %s1659, 4
          %s1671 = int_to_ptr.vmem [resolvable:$true] %s1670
          %1673 = dma.vmem_to_hbm [thread:$0]  %s1671, 128, %s1668, %s1656
        $region56: #{tpu_custom_call.1} parent=51 // pred_fallthru
          _
      $region52: #{tpu_custom_call.1} parent=5 // pred_fallthru
        _
      %p1674 = scmp.le.s32.totalorder 2, %s17
      // Predicated region
      $region57: #{tpu_custom_call.1} parent=5 // pred_check
        %p1675 = pneg %p1674
      $region58: #{tpu_custom_call.1} parent=5 // pred_check_branch
        %1677 = sbr.rel (%p1675) target = $region60
      $region59: #{tpu_custom_call.1} parent=5 // pred_region
        %s1678 = ssub.s32 %s17, 2
        // Predicated region
        $region61: #{tpu_custom_call.1} parent=59 // pred_check
          %p1679 = pneg %p219
        $region62: #{tpu_custom_call.1} parent=59 // pred_check_branch
          %1681 = sbr.rel (%p1679) target = $region64
        $region63: #{tpu_custom_call.1} parent=59 // pred_region
          %s1682 = sand.u32 %s204, 1
          %s1683 = scalar_lea.sflag [#allocation3], %s1682
          %s1684 = sand.u32 %s204, 1
          %s1685 = smul.addr %s1684, 8
          %s1686 = scalar_lea.vmem [#allocation2], %s1685
          %1687 = dma.done %s1683, 128
        $region64: #{tpu_custom_call.1} parent=59 // pred_fallthru
          _
      $region60: #{tpu_custom_call.1} parent=5 // pred_fallthru
        _
    $region6: #{tpu_custom_call.1} parent=1 // loop_footer
      %s21 = sadd.s32 1, %s17
    $region7: #{tpu_custom_call.1} parent=1 // loop_footer_branch
      %16 = sbr.rel target = $region3
    $region8: #{tpu_custom_call.1} parent=1 // loop_exit
      _
    %1688 = vsyncpa [#allocation3], 1
    %s1689 = scalar_lea.sflag [#allocation3], 1
    %1690 = vsyncpa %s1689, 1

</llo_original>
